<compile_context>
chip_gen: v6e
topology: v6e:2x2x1
jax: 0.10.0
libtpu: 0.0.40
codegen_flags: <defaults>
</compile_context>

<pallas_src>
import jax
import jax.numpy as jnp
from jax import lax
from jax.experimental import pallas as pl
from jax.experimental.pallas import tpu as pltpu

# ---- toy BERT-embeddings config ----
BATCH = 2
SEQ = 8
HIDDEN = 128            # = vreg lane width -> lane-dense everywhere
VOCAB = 512
MAX_POS = 64
TYPE_VOCAB = 2          # token_type vocab
TIMESTEP_VOCAB = 4      # timestep_type vocab (fixed to 4 in the module)
LN_EPS = 1e-12


def bert_embeddings_kernel(idx_ref, tbl_ref, gamma_ref, beta_ref, out_ref):
    """idx_ref: (N, 4) int32 row indices into the fused table (already offset).
    tbl_ref: (K, H) f32 fused embedding table.
    gamma_ref/beta_ref: (1, H) f32 LayerNorm affine params.
    out_ref: (N, H) f32 output."""
    idx = idx_ref[...]                       # (N, 4)
    tbl = tbl_ref[...]                       # (K, H)
    n = idx.shape[0]
    k = tbl.shape[0]

    # One multi-hot over the fused table: index ranges are disjoint, so the
    # sum of the four one-hots selects (and sums) all four embedding rows in
    # a single MXU matmul.
    iota = lax.broadcasted_iota(jnp.int32, (n, k), 1)
    multi_hot = ((iota == idx[:, 0:1]).astype(jnp.float32)
                 + (iota == idx[:, 1:2]).astype(jnp.float32)
                 + (iota == idx[:, 2:3]).astype(jnp.float32)
                 + (iota == idx[:, 3:4]).astype(jnp.float32))

    emb = jnp.dot(multi_hot, tbl,
                  preferred_element_type=jnp.float32,
                  precision=lax.Precision.HIGHEST)        # (N, H) f32

    # LayerNorm over the hidden dim, one-pass statistics in f32.
    inv_h = 1.0 / emb.shape[-1]
    s1 = jnp.sum(emb, axis=-1, keepdims=True)
    s2 = jnp.sum(emb * emb, axis=-1, keepdims=True)
    mean = s1 * inv_h
    var = s2 * inv_h - mean * mean
    normed = (emb - mean) * lax.rsqrt(var + LN_EPS)
    out = normed * gamma_ref[...] + beta_ref[...]

    # Dropout: identity in eval mode.
    out_ref[...] = out.astype(out_ref.dtype)


def bert_embeddings_pallas(input_ids, token_type_ids, position_ids,
                           timestep_type_ids, params):
    B, S = input_ids.shape
    H = params["word_emb"].shape[1]
    N = B * S

    # Fuse the four tables row-wise; compute the per-table row offsets.
    n_word = params["word_emb"].shape[0]
    n_pos = params["pos_emb"].shape[0]
    n_tok = params["tok_emb"].shape[0]
    off_pos = n_word
    off_tok = off_pos + n_pos
    off_ts = off_tok + n_tok
    k_total = off_ts + params["ts_emb"].shape[0]

    fused_tbl = jnp.concatenate(
        [params["word_emb"], params["pos_emb"],
         params["tok_emb"], params["ts_emb"]], axis=0)
    # Lane-align the multi-hot's last dim (and sublane-align the table rows).
    k_pad = (-k_total) % 128
    if k_pad:
        fused_tbl = jnp.pad(fused_tbl, ((0, k_pad), (0, 0)))

    # Pack the four index streams into one (N, 4) int32 array, pre-offset into
    # the fused table.  (All ids are in range here; an out-of-range id would
    # select an all-zero padded row rather than clamping like jnp.take.)
    idx = jnp.stack(
        [input_ids.reshape(N).astype(jnp.int32),
         position_ids.reshape(N).astype(jnp.int32) + off_pos,
         token_type_ids.reshape(N).astype(jnp.int32) + off_tok,
         timestep_type_ids.reshape(N).astype(jnp.int32) + off_ts],
        axis=1)

    vmem = pl.BlockSpec(memory_space=pltpu.MemorySpace.VMEM)
    out = pl.pallas_call(
        bert_embeddings_kernel,
        out_shape=jax.ShapeDtypeStruct((N, H), jnp.float32),
        in_specs=[vmem, vmem, vmem, vmem],
        out_specs=vmem,
    )(idx, fused_tbl, params["gamma"], params["beta"])
    return out.reshape(B, S, H)


# ---- pure-JAX reference (same math) for a sanity check ----
def bert_embeddings_ref(input_ids, token_type_ids, position_ids,
                        timestep_type_ids, p):
    emb = (jnp.take(p["word_emb"], input_ids, axis=0)
           + jnp.take(p["pos_emb"], position_ids, axis=0)
           + jnp.take(p["tok_emb"], token_type_ids, axis=0)
           + jnp.take(p["ts_emb"], timestep_type_ids, axis=0))
    mean = jnp.mean(emb, axis=-1, keepdims=True)
    var = jnp.mean((emb - mean) ** 2, axis=-1, keepdims=True)
    return (emb - mean) * lax.rsqrt(var + LN_EPS) * p["gamma"] + p["beta"]


if __name__ == "__main__":
    key = jax.random.PRNGKey(0)
    k_ids, k_w, k_p, k_t, k_ts = jax.random.split(key, 5)

    input_ids = jax.random.randint(k_ids, (BATCH, SEQ), 0, VOCAB, dtype=jnp.int32)
    # Defaults exactly as in the PyTorch forward when the optional args are None:
    position_ids = jnp.broadcast_to(
        jnp.arange(SEQ, dtype=jnp.int32)[None, :], (BATCH, SEQ))
    token_type_ids = jnp.zeros((BATCH, SEQ), jnp.int32)
    timestep_type_ids = jnp.ones((BATCH, SEQ), jnp.int32)

    std = 0.02
    params = {
        "word_emb": jax.random.normal(k_w, (VOCAB, HIDDEN), jnp.float32) * std,
        "pos_emb": jax.random.normal(k_p, (MAX_POS, HIDDEN), jnp.float32) * std,
        "tok_emb": jax.random.normal(k_t, (TYPE_VOCAB, HIDDEN), jnp.float32) * std,
        "ts_emb": jax.random.normal(k_ts, (TIMESTEP_VOCAB, HIDDEN), jnp.float32) * std,
        "gamma": jnp.ones((1, HIDDEN), jnp.float32),
        "beta": jnp.zeros((1, HIDDEN), jnp.float32),
    }

    y = bert_embeddings_pallas(input_ids, token_type_ids, position_ids,
                               timestep_type_ids, params)
    y = jax.block_until_ready(y)

    y_ref = bert_embeddings_ref(input_ids, token_type_ids, position_ids,
                                timestep_type_ids, params)
    assert jnp.allclose(y, y_ref, atol=1e-5, rtol=1e-5), "mismatch vs reference"

    print("KERNEL_OK")
</pallas_src>

<mosaic_0001>
module attributes {stable_mosaic.version = 11 : i64} {
  func.func @bert_embeddings_kernel(%arg0: memref<16x4xi32, #tpu.memory_space<vmem>>, %arg1: memref<640x128xf32, #tpu.memory_space<vmem>>, %arg2: memref<1x128xf32, #tpu.memory_space<vmem>>, %arg3: memref<1x128xf32, #tpu.memory_space<vmem>>, %arg4: memref<16x128xf32, #tpu.memory_space<vmem>>) attributes {dimension_semantics = [], scalar_prefetch = 0 : i64, scratch_operands = 0 : i64, tpu.core_type = #tpu.core_type<tc>} {
    %c0 = arith.constant 0 : index
    %c0_0 = arith.constant 0 : index
    %0 = vector.load %arg0[%c0, %c0_0] : memref<16x4xi32, #tpu.memory_space<vmem>>, vector<16x4xi32>
    %c0_1 = arith.constant 0 : index
    %c0_2 = arith.constant 0 : index
    %1 = vector.load %arg1[%c0_1, %c0_2] : memref<640x128xf32, #tpu.memory_space<vmem>>, vector<640x128xf32>
    %2 = tpu.iota {dimensions = array<i32: 1>} : vector<16x640xi32>
    %3 = vector.extract_strided_slice %0 {offsets = [0, 0], sizes = [16, 1], strides = [1, 1]} : vector<16x4xi32> to vector<16x1xi32>
    %4 = vector.broadcast %3 : vector<16x1xi32> to vector<16x640xi32>
    %5 = arith.cmpi eq, %2, %4 : vector<16x640xi32>
    %6 = arith.extui %5 : vector<16x640xi1> to vector<16x640xi32>
    %7 = arith.sitofp %6 : vector<16x640xi32> to vector<16x640xf32>
    %8 = vector.extract_strided_slice %0 {offsets = [0, 1], sizes = [16, 1], strides = [1, 1]} : vector<16x4xi32> to vector<16x1xi32>
    %9 = vector.broadcast %8 : vector<16x1xi32> to vector<16x640xi32>
    %10 = arith.cmpi eq, %2, %9 : vector<16x640xi32>
    %11 = arith.extui %10 : vector<16x640xi1> to vector<16x640xi32>
    %12 = arith.sitofp %11 : vector<16x640xi32> to vector<16x640xf32>
    %13 = arith.addf %7, %12 : vector<16x640xf32>
    %14 = vector.extract_strided_slice %0 {offsets = [0, 2], sizes = [16, 1], strides = [1, 1]} : vector<16x4xi32> to vector<16x1xi32>
    %15 = vector.broadcast %14 : vector<16x1xi32> to vector<16x640xi32>
    %16 = arith.cmpi eq, %2, %15 : vector<16x640xi32>
    %17 = arith.extui %16 : vector<16x640xi1> to vector<16x640xi32>
    %18 = arith.sitofp %17 : vector<16x640xi32> to vector<16x640xf32>
    %19 = arith.addf %13, %18 : vector<16x640xf32>
    %20 = vector.extract_strided_slice %0 {offsets = [0, 3], sizes = [16, 1], strides = [1, 1]} : vector<16x4xi32> to vector<16x1xi32>
    %21 = vector.broadcast %20 : vector<16x1xi32> to vector<16x640xi32>
    %22 = arith.cmpi eq, %2, %21 : vector<16x640xi32>
    %23 = arith.extui %22 : vector<16x640xi1> to vector<16x640xi32>
    %24 = arith.sitofp %23 : vector<16x640xi32> to vector<16x640xf32>
    %25 = arith.addf %19, %24 : vector<16x640xf32>
    %cst = arith.constant dense<0.000000e+00> : vector<16x128xf32>
    %26 = tpu.matmul %25, %1, %cst {dimension_numbers = #tpu.dot_dimension_numbers<[1], [0], [0], [1], [0, 0, 1, 1], [], []>, precision = #tpu.contract_precision<fp32>} : vector<16x640xf32>, vector<640x128xf32>, vector<16x128xf32> -> vector<16x128xf32>
    %cst_3 = arith.constant dense<0.000000e+00> : vector<16xf32>
    %27 = vector.multi_reduction <add>, %26, %cst_3 [1] : vector<16x128xf32> to vector<16xf32>
    %28 = vector.shape_cast %27 : vector<16xf32> to vector<16x1xf32>
    %29 = arith.mulf %26, %26 : vector<16x128xf32>
    %cst_4 = arith.constant dense<0.000000e+00> : vector<16xf32>
    %30 = vector.multi_reduction <add>, %29, %cst_4 [1] : vector<16x128xf32> to vector<16xf32>
    %31 = vector.shape_cast %30 : vector<16xf32> to vector<16x1xf32>
    %cst_5 = arith.constant 7.812500e-03 : f32
    %32 = vector.broadcast %cst_5 : f32 to vector<16x1xf32>
    %33 = arith.mulf %28, %32 : vector<16x1xf32>
    %cst_6 = arith.constant 7.812500e-03 : f32
    %34 = vector.broadcast %cst_6 : f32 to vector<16x1xf32>
    %35 = arith.mulf %31, %34 : vector<16x1xf32>
    %36 = arith.mulf %33, %33 : vector<16x1xf32>
    %37 = arith.subf %35, %36 : vector<16x1xf32>
    %38 = vector.broadcast %33 : vector<16x1xf32> to vector<16x128xf32>
    %39 = arith.subf %26, %38 : vector<16x128xf32>
    %cst_7 = arith.constant 9.99999996E-13 : f32
    %40 = vector.broadcast %cst_7 : f32 to vector<16x1xf32>
    %41 = arith.addf %37, %40 : vector<16x1xf32>
    %42 = math.rsqrt %41 : vector<16x1xf32>
    %43 = vector.broadcast %42 : vector<16x1xf32> to vector<16x128xf32>
    %44 = arith.mulf %39, %43 : vector<16x128xf32>
    %c0_8 = arith.constant 0 : index
    %c0_9 = arith.constant 0 : index
    %45 = vector.load %arg2[%c0_8, %c0_9] : memref<1x128xf32, #tpu.memory_space<vmem>>, vector<1x128xf32>
    %46 = vector.broadcast %45 : vector<1x128xf32> to vector<16x128xf32>
    %47 = arith.mulf %44, %46 : vector<16x128xf32>
    %c0_10 = arith.constant 0 : index
    %c0_11 = arith.constant 0 : index
    %48 = vector.load %arg3[%c0_10, %c0_11] : memref<1x128xf32, #tpu.memory_space<vmem>>, vector<1x128xf32>
    %49 = vector.broadcast %48 : vector<1x128xf32> to vector<16x128xf32>
    %50 = arith.addf %47, %49 : vector<16x128xf32>
    %c0_12 = arith.constant 0 : index
    %c0_13 = arith.constant 0 : index
    %51 = vector.load %arg4[%c0_12, %c0_13] : memref<16x128xf32, #tpu.memory_space<vmem>>, vector<16x128xf32>
    tpu.vector_store %arg4[%c0_12, %c0_13], %50 {strides = array<i32>} : memref<16x128xf32, #tpu.memory_space<vmem>>, vector<16x128xf32>,
    return
  }
}

</mosaic_0001>

<llo_original>
// kernel: tpu_custom_call.1
$region0: #{tpu_custom_call.1}
  #allocation0 [shape = 'u32[]', space=smem, size = 0x4, offset = 0x4, fixed_abs, tag = 'smem constant byte address 0x4 - core index']
  #allocation1 [shape = 'u32[144,128]{1,0:T(1,128)}', space=vmem, size = 0x12000, scoped, tag = 'internal scratch']
  %s0 = inlined_call_operand.vmem [shape: s32[16,4], index: 0, kind: input, shape index: {}]
  %s1 = inlined_call_operand.hbm [shape: f32[640,128], index: 1, kind: input, shape index: {}]
  %s2 = inlined_call_operand.vmem [shape: f32[1,128], index: 2, kind: input, shape index: {}]
  %s3 = inlined_call_operand.vmem [shape: f32[1,128], index: 3, kind: input, shape index: {}]
  %s4 = inlined_call_operand.hbm [shape: f32[16,128], index: 4, kind: output, shape index: {}]
  %s5 = sld [smem:[#allocation0]]
  $region30: #{tpu_custom_call.1} parent=0
    _
  %s7 = ssub.s32 1, %s5
  %s8 = scalar_select 0, %s7, %s5
  $region1: #{tpu_custom_call.1} parent=0
    #allocation2 [shape = 'u8[327680]{0}', space=vmem, size = 0x50000, scoped, tag = 'input window, operand 1, single buffered']
    #allocation3 [shape = 's32[1]{0}', space=sflag, size = 0x4, scoped, tag = 'scoped memory for tpu_custom_call.1']
    #allocation4 [shape = 's32[1]{0}', space=sflag, size = 0x4, scoped, tag = 'scoped memory for tpu_custom_call.1']
    #allocation5 [shape = 'u8[8192]{0}', space=vmem, size = 0x2000, scoped, tag = 'output window, operand 0, single buffered']
    %9 = vsyncpa [#allocation3], 0
    %10 = vsyncpa [#allocation4], 0
    // Predicated region
    $region2: #{tpu_custom_call.1} parent=1 // pred_check
      _
    $region3: #{tpu_custom_call.1} parent=1 // pred_check_branch
      %12 = sbr.rel (0) target = $region5
    $region4: #{tpu_custom_call.1} parent=1 // pred_region
      _
    $region5: #{tpu_custom_call.1} parent=1 // pred_fallthru
      _
    // Predicated region
    $region6: #{tpu_custom_call.1} parent=1 // pred_check
      _
    $region7: #{tpu_custom_call.1} parent=1 // pred_check_branch
      %14 = sbr.rel (0) target = $region9
    $region8: #{tpu_custom_call.1} parent=1 // pred_region
      %s16 = ssub.s32 10240, 10240
      %17 = vsyncadd [#allocation3], %s16
      %s18 = sshll.u32 [#allocation2], 4
      %s19 = int_to_ptr.vmem [resolvable:$true] %s18
      %24 = dma.hbm_to_vmem [thread:$0]  %s1, 10240, %s19, [#allocation3], 128, 128, 8
    $region9: #{tpu_custom_call.1} parent=1 // pred_fallthru
      _
    // Predicated region
    $region10: #{tpu_custom_call.1} parent=1 // pred_check
      _
    $region11: #{tpu_custom_call.1} parent=1 // pred_check_branch
      %26 = sbr.rel (0) target = $region13
    $region12: #{tpu_custom_call.1} parent=1 // pred_region
      _
    $region13: #{tpu_custom_call.1} parent=1 // pred_fallthru
      _
    // Predicated region
    $region14: #{tpu_custom_call.1} parent=1 // pred_check
      _
    $region15: #{tpu_custom_call.1} parent=1 // pred_check_branch
      %28 = sbr.rel (0) target = $region17
    $region16: #{tpu_custom_call.1} parent=1 // pred_region
      _
    $region17: #{tpu_custom_call.1} parent=1 // pred_fallthru
      _
    // Predicated region
    $region18: #{tpu_custom_call.1} parent=1 // pred_check
      _
    $region19: #{tpu_custom_call.1} parent=1 // pred_check_branch
      %30 = sbr.rel (0) target = $region21
    $region20: #{tpu_custom_call.1} parent=1 // pred_region
      %31 = dma.done [#allocation3], 10240
    $region21: #{tpu_custom_call.1} parent=1 // pred_fallthru
      _
    %v32 = vld [vmem:[%s0] sm:$0xff]
    %v33 = vld [vmem:[%s0 + $0x8] sm:$0xff]
    %v34 = vld [vmem:[#allocation2] sm:$0xff]
    %v35 = vld [vmem:[#allocation2 + $0x8] sm:$0xff]
    %v36 = vld [vmem:[#allocation2 + $0x10] sm:$0xff]
    %v37 = vld [vmem:[#allocation2 + $0x18] sm:$0xff]
    %v38 = vld [vmem:[#allocation2 + $0x20] sm:$0xff]
    %v39 = vld [vmem:[#allocation2 + $0x28] sm:$0xff]
    %v40 = vld [vmem:[#allocation2 + $0x30] sm:$0xff]
    %v41 = vld [vmem:[#allocation2 + $0x38] sm:$0xff]
    %v42 = vld [vmem:[#allocation2 + $0x40] sm:$0xff]
    %v43 = vld [vmem:[#allocation2 + $0x48] sm:$0xff]
    %v44 = vld [vmem:[#allocation2 + $0x50] sm:$0xff]
    %v45 = vld [vmem:[#allocation2 + $0x58] sm:$0xff]
    %v46 = vld [vmem:[#allocation2 + $0x60] sm:$0xff]
    %v47 = vld [vmem:[#allocation2 + $0x68] sm:$0xff]
    %v48 = vld [vmem:[#allocation2 + $0x70] sm:$0xff]
    %v49 = vld [vmem:[#allocation2 + $0x78] sm:$0xff]
    %v50 = vld [vmem:[#allocation2 + $0x80] sm:$0xff]
    %v51 = vld [vmem:[#allocation2 + $0x88] sm:$0xff]
    %v52 = vld [vmem:[#allocation2 + $0x90] sm:$0xff]
    %v53 = vld [vmem:[#allocation2 + $0x98] sm:$0xff]
    %v54 = vld [vmem:[#allocation2 + $0xa0] sm:$0xff]
    %v55 = vld [vmem:[#allocation2 + $0xa8] sm:$0xff]
    %v56 = vld [vmem:[#allocation2 + $0xb0] sm:$0xff]
    %v57 = vld [vmem:[#allocation2 + $0xb8] sm:$0xff]
    %v58 = vld [vmem:[#allocation2 + $0xc0] sm:$0xff]
    %v59 = vld [vmem:[#allocation2 + $0xc8] sm:$0xff]
    %v60 = vld [vmem:[#allocation2 + $0xd0] sm:$0xff]
    %v61 = vld [vmem:[#allocation2 + $0xd8] sm:$0xff]
    %v62 = vld [vmem:[#allocation2 + $0xe0] sm:$0xff]
    %v63 = vld [vmem:[#allocation2 + $0xe8] sm:$0xff]
    %v64 = vld [vmem:[#allocation2 + $0xf0] sm:$0xff]
    %v65 = vld [vmem:[#allocation2 + $0xf8] sm:$0xff]
    %v66 = vld [vmem:[#allocation2 + $0x100] sm:$0xff]
    %v67 = vld [vmem:[#allocation2 + $0x108] sm:$0xff]
    %v68 = vld [vmem:[#allocation2 + $0x110] sm:$0xff]
    %v69 = vld [vmem:[#allocation2 + $0x118] sm:$0xff]
    %v70 = vld [vmem:[#allocation2 + $0x120] sm:$0xff]
    %v71 = vld [vmem:[#allocation2 + $0x128] sm:$0xff]
    %v72 = vld [vmem:[#allocation2 + $0x130] sm:$0xff]
    %v73 = vld [vmem:[#allocation2 + $0x138] sm:$0xff]
    %v74 = vld [vmem:[#allocation2 + $0x140] sm:$0xff]
    %v75 = vld [vmem:[#allocation2 + $0x148] sm:$0xff]
    %v76 = vld [vmem:[#allocation2 + $0x150] sm:$0xff]
    %v77 = vld [vmem:[#allocation2 + $0x158] sm:$0xff]
    %v78 = vld [vmem:[#allocation2 + $0x160] sm:$0xff]
    %v79 = vld [vmem:[#allocation2 + $0x168] sm:$0xff]
    %v80 = vld [vmem:[#allocation2 + $0x170] sm:$0xff]
    %v81 = vld [vmem:[#allocation2 + $0x178] sm:$0xff]
    %v82 = vld [vmem:[#allocation2 + $0x180] sm:$0xff]
    %v83 = vld [vmem:[#allocation2 + $0x188] sm:$0xff]
    %v84 = vld [vmem:[#allocation2 + $0x190] sm:$0xff]
    %v85 = vld [vmem:[#allocation2 + $0x198] sm:$0xff]
    %v86 = vld [vmem:[#allocation2 + $0x1a0] sm:$0xff]
    %v87 = vld [vmem:[#allocation2 + $0x1a8] sm:$0xff]
    %v88 = vld [vmem:[#allocation2 + $0x1b0] sm:$0xff]
    %v89 = vld [vmem:[#allocation2 + $0x1b8] sm:$0xff]
    %v90 = vld [vmem:[#allocation2 + $0x1c0] sm:$0xff]
    %v91 = vld [vmem:[#allocation2 + $0x1c8] sm:$0xff]
    %v92 = vld [vmem:[#allocation2 + $0x1d0] sm:$0xff]
    %v93 = vld [vmem:[#allocation2 + $0x1d8] sm:$0xff]
    %v94 = vld [vmem:[#allocation2 + $0x1e0] sm:$0xff]
    %v95 = vld [vmem:[#allocation2 + $0x1e8] sm:$0xff]
    %v96 = vld [vmem:[#allocation2 + $0x1f0] sm:$0xff]
    %v97 = vld [vmem:[#allocation2 + $0x1f8] sm:$0xff]
    %v98 = vld [vmem:[#allocation2 + $0x200] sm:$0xff]
    %v99 = vld [vmem:[#allocation2 + $0x208] sm:$0xff]
    %v100 = vld [vmem:[#allocation2 + $0x210] sm:$0xff]
    %v101 = vld [vmem:[#allocation2 + $0x218] sm:$0xff]
    %v102 = vld [vmem:[#allocation2 + $0x220] sm:$0xff]
    %v103 = vld [vmem:[#allocation2 + $0x228] sm:$0xff]
    %v104 = vld [vmem:[#allocation2 + $0x230] sm:$0xff]
    %v105 = vld [vmem:[#allocation2 + $0x238] sm:$0xff]
    %v106 = vld [vmem:[#allocation2 + $0x240] sm:$0xff]
    %v107 = vld [vmem:[#allocation2 + $0x248] sm:$0xff]
    %v108 = vld [vmem:[#allocation2 + $0x250] sm:$0xff]
    %v109 = vld [vmem:[#allocation2 + $0x258] sm:$0xff]
    %v110 = vld [vmem:[#allocation2 + $0x260] sm:$0xff]
    %v111 = vld [vmem:[#allocation2 + $0x268] sm:$0xff]
    %v112 = vld [vmem:[#allocation2 + $0x270] sm:$0xff]
    %v113 = vld [vmem:[#allocation2 + $0x278] sm:$0xff]
    %v114 = vlaneseq
    %v115 = vand.u32 %v114, 127
    %v116 = vadd.s32 %v115, 128
    %v117 = vadd.s32 %v115, 256
    %v118 = vadd.s32 %v115, 384
    %v119 = vadd.s32 %v115, 512
    %120 = vset.pattern.permute.xlu0 0
    %121 = vperm.xlu0 %120, %v32
    %v122 = vpop.permute.xlu0 %121
    %123 = vset.pattern.permute.xlu0 0
    %124 = vperm.xlu0 %123, %v33
    %v125 = vpop.permute.xlu0 %124
    %vm126 = vcmp.eq.s32.totalorder %v115, %v122
    %vm127 = vcmp.eq.s32.totalorder %v116, %v122
    %vm128 = vcmp.eq.s32.totalorder %v117, %v122
    %vm129 = vcmp.eq.s32.totalorder %v118, %v122
    %vm130 = vcmp.eq.s32.totalorder %v119, %v122
    %vm131 = vcmp.eq.s32.totalorder %v115, %v125
    %vm132 = vcmp.eq.s32.totalorder %v116, %v125
    %vm133 = vcmp.eq.s32.totalorder %v117, %v125
    %vm134 = vcmp.eq.s32.totalorder %v118, %v125
    %vm135 = vcmp.eq.s32.totalorder %v119, %v125
    %v136 = vsel %vm126, 1, 0
    %v137 = vsel %vm127, 1, 0
    %v138 = vsel %vm128, 1, 0
    %v139 = vsel %vm129, 1, 0
    %v140 = vsel %vm130, 1, 0
    %v141 = vsel %vm131, 1, 0
    %v142 = vsel %vm132, 1, 0
    %v143 = vsel %vm133, 1, 0
    %v144 = vsel %vm134, 1, 0
    %v145 = vsel %vm135, 1, 0
    %v146 = vcvt.s32.f32 %v136
    %v147 = vcvt.s32.f32 %v137
    %v148 = vcvt.s32.f32 %v138
    %v149 = vcvt.s32.f32 %v139
    %v150 = vcvt.s32.f32 %v140
    %v151 = vcvt.s32.f32 %v141
    %v152 = vcvt.s32.f32 %v142
    %v153 = vcvt.s32.f32 %v143
    %v154 = vcvt.s32.f32 %v144
    %v155 = vcvt.s32.f32 %v145
    %156 = vset.pattern.permute.xlu0 1
    %157 = vperm.xlu0 %156, %v32
    %v158 = vpop.permute.xlu0 %157
    %159 = vset.pattern.permute.xlu0 1
    %160 = vperm.xlu0 %159, %v33
    %v161 = vpop.permute.xlu0 %160
    %vm162 = vcmp.eq.s32.totalorder %v115, %v158
    %vm163 = vcmp.eq.s32.totalorder %v116, %v158
    %vm164 = vcmp.eq.s32.totalorder %v117, %v158
    %vm165 = vcmp.eq.s32.totalorder %v118, %v158
    %vm166 = vcmp.eq.s32.totalorder %v119, %v158
    %vm167 = vcmp.eq.s32.totalorder %v115, %v161
    %vm168 = vcmp.eq.s32.totalorder %v116, %v161
    %vm169 = vcmp.eq.s32.totalorder %v117, %v161
    %vm170 = vcmp.eq.s32.totalorder %v118, %v161
    %vm171 = vcmp.eq.s32.totalorder %v119, %v161
    %v172 = vsel %vm162, 1, 0
    %v173 = vsel %vm163, 1, 0
    %v174 = vsel %vm164, 1, 0
    %v175 = vsel %vm165, 1, 0
    %v176 = vsel %vm166, 1, 0
    %v177 = vsel %vm167, 1, 0
    %v178 = vsel %vm168, 1, 0
    %v179 = vsel %vm169, 1, 0
    %v180 = vsel %vm170, 1, 0
    %v181 = vsel %vm171, 1, 0
    %v182 = vcvt.s32.f32 %v172
    %v183 = vcvt.s32.f32 %v173
    %v184 = vcvt.s32.f32 %v174
    %v185 = vcvt.s32.f32 %v175
    %v186 = vcvt.s32.f32 %v176
    %v187 = vcvt.s32.f32 %v177
    %v188 = vcvt.s32.f32 %v178
    %v189 = vcvt.s32.f32 %v179
    %v190 = vcvt.s32.f32 %v180
    %v191 = vcvt.s32.f32 %v181
    %v192 = vadd.f32 %v146, %v182
    %v193 = vadd.f32 %v147, %v183
    %v194 = vadd.f32 %v148, %v184
    %v195 = vadd.f32 %v149, %v185
    %v196 = vadd.f32 %v150, %v186
    %v197 = vadd.f32 %v151, %v187
    %v198 = vadd.f32 %v152, %v188
    %v199 = vadd.f32 %v153, %v189
    %v200 = vadd.f32 %v154, %v190
    %v201 = vadd.f32 %v155, %v191
    %202 = vset.pattern.permute.xlu0 2
    %203 = vperm.xlu0 %202, %v32
    %v204 = vpop.permute.xlu0 %203
    %205 = vset.pattern.permute.xlu0 2
    %206 = vperm.xlu0 %205, %v33
    %v207 = vpop.permute.xlu0 %206
    %vm208 = vcmp.eq.s32.totalorder %v115, %v204
    %vm209 = vcmp.eq.s32.totalorder %v116, %v204
    %vm210 = vcmp.eq.s32.totalorder %v117, %v204
    %vm211 = vcmp.eq.s32.totalorder %v118, %v204
    %vm212 = vcmp.eq.s32.totalorder %v119, %v204
    %vm213 = vcmp.eq.s32.totalorder %v115, %v207
    %vm214 = vcmp.eq.s32.totalorder %v116, %v207
    %vm215 = vcmp.eq.s32.totalorder %v117, %v207
    %vm216 = vcmp.eq.s32.totalorder %v118, %v207
    %vm217 = vcmp.eq.s32.totalorder %v119, %v207
    %v218 = vsel %vm208, 1, 0
    %v219 = vsel %vm209, 1, 0
    %v220 = vsel %vm210, 1, 0
    %v221 = vsel %vm211, 1, 0
    %v222 = vsel %vm212, 1, 0
    %v223 = vsel %vm213, 1, 0
    %v224 = vsel %vm214, 1, 0
    %v225 = vsel %vm215, 1, 0
    %v226 = vsel %vm216, 1, 0
    %v227 = vsel %vm217, 1, 0
    %v228 = vcvt.s32.f32 %v218
    %v229 = vcvt.s32.f32 %v219
    %v230 = vcvt.s32.f32 %v220
    %v231 = vcvt.s32.f32 %v221
    %v232 = vcvt.s32.f32 %v222
    %v233 = vcvt.s32.f32 %v223
    %v234 = vcvt.s32.f32 %v224
    %v235 = vcvt.s32.f32 %v225
    %v236 = vcvt.s32.f32 %v226
    %v237 = vcvt.s32.f32 %v227
    %v238 = vadd.f32 %v192, %v228
    %v239 = vadd.f32 %v193, %v229
    %v240 = vadd.f32 %v194, %v230
    %v241 = vadd.f32 %v195, %v231
    %v242 = vadd.f32 %v196, %v232
    %v243 = vadd.f32 %v197, %v233
    %v244 = vadd.f32 %v198, %v234
    %v245 = vadd.f32 %v199, %v235
    %v246 = vadd.f32 %v200, %v236
    %v247 = vadd.f32 %v201, %v237
    %248 = vset.pattern.permute.xlu0 3
    %249 = vperm.xlu0 %248, %v32
    %v250 = vpop.permute.xlu0 %249
    %251 = vset.pattern.permute.xlu0 3
    %252 = vperm.xlu0 %251, %v33
    %v253 = vpop.permute.xlu0 %252
    %vm254 = vcmp.eq.s32.totalorder %v115, %v250
    %vm255 = vcmp.eq.s32.totalorder %v116, %v250
    %vm256 = vcmp.eq.s32.totalorder %v117, %v250
    %vm257 = vcmp.eq.s32.totalorder %v118, %v250
    %vm258 = vcmp.eq.s32.totalorder %v119, %v250
    %vm259 = vcmp.eq.s32.totalorder %v115, %v253
    %vm260 = vcmp.eq.s32.totalorder %v116, %v253
    %vm261 = vcmp.eq.s32.totalorder %v117, %v253
    %vm262 = vcmp.eq.s32.totalorder %v118, %v253
    %vm263 = vcmp.eq.s32.totalorder %v119, %v253
    %v264 = vsel %vm254, 1, 0
    %v265 = vsel %vm255, 1, 0
    %v266 = vsel %vm256, 1, 0
    %v267 = vsel %vm257, 1, 0
    %v268 = vsel %vm258, 1, 0
    %v269 = vsel %vm259, 1, 0
    %v270 = vsel %vm260, 1, 0
    %v271 = vsel %vm261, 1, 0
    %v272 = vsel %vm262, 1, 0
    %v273 = vsel %vm263, 1, 0
    %v274 = vcvt.s32.f32 %v264
    %v275 = vcvt.s32.f32 %v265
    %v276 = vcvt.s32.f32 %v266
    %v277 = vcvt.s32.f32 %v267
    %v278 = vcvt.s32.f32 %v268
    %v279 = vcvt.s32.f32 %v269
    %v280 = vcvt.s32.f32 %v270
    %v281 = vcvt.s32.f32 %v271
    %v282 = vcvt.s32.f32 %v272
    %v283 = vcvt.s32.f32 %v273
    %v284 = vadd.f32 %v238, %v274
    %v285 = vadd.f32 %v239, %v275
    %v286 = vadd.f32 %v240, %v276
    %v287 = vadd.f32 %v241, %v277
    %v288 = vadd.f32 %v242, %v278
    %v289 = vadd.f32 %v243, %v279
    %v290 = vadd.f32 %v244, %v280
    %v291 = vadd.f32 %v245, %v281
    %v292 = vadd.f32 %v246, %v282
    %v293 = vadd.f32 %v247, %v283
    %294 = vmatprep.subr.mxu0 0.0
    %v295 = vand.u32 %v49, 4294901760
    %296 = vmatpush1.msra.mxu0 %v295
    %297 = vmatprep.subr.mxu0 0.0
    %v298 = vand.u32 %v48, 4294901760
    %299 = vmatpush1.msra.mxu0 %v298
    %300 = vmatprep.subr.mxu0 0.0
    %v301 = vand.u32 %v47, 4294901760
    %302 = vmatpush1.msra.mxu0 %v301
    %303 = vmatprep.subr.mxu0 0.0
    %v304 = vand.u32 %v46, 4294901760
    %305 = vmatpush1.msra.mxu0 %v304
    %306 = vmatprep.subr.mxu0 0.0
    %v307 = vand.u32 %v45, 4294901760
    %308 = vmatpush1.msra.mxu0 %v307
    %309 = vmatprep.subr.mxu0 0.0
    %v310 = vand.u32 %v44, 4294901760
    %311 = vmatpush1.msra.mxu0 %v310
    %312 = vmatprep.subr.mxu0 0.0
    %v313 = vand.u32 %v43, 4294901760
    %314 = vmatpush1.msra.mxu0 %v313
    %315 = vmatprep.subr.mxu0 0.0
    %v316 = vand.u32 %v42, 4294901760
    %317 = vmatpush1.msra.mxu0 %v316
    %318 = vmatprep.subr.mxu0 0.0
    %v319 = vand.u32 %v41, 4294901760
    %320 = vmatpush1.msra.mxu0 %v319
    %321 = vmatprep.subr.mxu0 0.0
    %v322 = vand.u32 %v40, 4294901760
    %323 = vmatpush1.msra.mxu0 %v322
    %324 = vmatprep.subr.mxu0 0.0
    %v325 = vand.u32 %v39, 4294901760
    %326 = vmatpush1.msra.mxu0 %v325
    %327 = vmatprep.subr.mxu0 0.0
    %v328 = vand.u32 %v38, 4294901760
    %329 = vmatpush1.msra.mxu0 %v328
    %330 = vmatprep.subr.mxu0 0.0
    %v331 = vand.u32 %v37, 4294901760
    %332 = vmatpush1.msra.mxu0 %v331
    %333 = vmatprep.subr.mxu0 0.0
    %v334 = vand.u32 %v36, 4294901760
    %335 = vmatpush1.msra.mxu0 %v334
    %336 = vmatprep.subr.mxu0 0.0
    %v337 = vand.u32 %v35, 4294901760
    %338 = vmatpush1.msra.mxu0 %v337
    %339 = vmatprep.subr.mxu0 0.0
    %v340 = vand.u32 %v34, 4294901760
    %341 = vmatpush1.msra.mxu0 %v340
    %342 = vmatprep.subr.mxu0 0.0
    %v343 = vand.u32 %v65, 4294901760
    %344 = vmatpush2.msra.mxu0 %v343
    %345 = vmatprep.subr.mxu0 0.0
    %v346 = vand.u32 %v64, 4294901760
    %347 = vmatpush2.msra.mxu0 %v346
    %348 = vmatprep.subr.mxu0 0.0
    %v349 = vand.u32 %v63, 4294901760
    %350 = vmatpush2.msra.mxu0 %v349
    %351 = vmatprep.subr.mxu0 0.0
    %v352 = vand.u32 %v62, 4294901760
    %353 = vmatpush2.msra.mxu0 %v352
    %354 = vmatprep.subr.mxu0 0.0
    %v355 = vand.u32 %v61, 4294901760
    %356 = vmatpush2.msra.mxu0 %v355
    %357 = vmatprep.subr.mxu0 0.0
    %v358 = vand.u32 %v60, 4294901760
    %359 = vmatpush2.msra.mxu0 %v358
    %360 = vmatprep.subr.mxu0 0.0
    %v361 = vand.u32 %v59, 4294901760
    %362 = vmatpush2.msra.mxu0 %v361
    %363 = vmatprep.subr.mxu0 0.0
    %v364 = vand.u32 %v58, 4294901760
    %365 = vmatpush2.msra.mxu0 %v364
    %366 = vmatprep.subr.mxu0 0.0
    %v367 = vand.u32 %v57, 4294901760
    %368 = vmatpush2.msra.mxu0 %v367
    %369 = vmatprep.subr.mxu0 0.0
    %v370 = vand.u32 %v56, 4294901760
    %371 = vmatpush2.msra.mxu0 %v370
    %372 = vmatprep.subr.mxu0 0.0
    %v373 = vand.u32 %v55, 4294901760
    %374 = vmatpush2.msra.mxu0 %v373
    %375 = vmatprep.subr.mxu0 0.0
    %v376 = vand.u32 %v54, 4294901760
    %377 = vmatpush2.msra.mxu0 %v376
    %378 = vmatprep.subr.mxu0 0.0
    %v379 = vand.u32 %v53, 4294901760
    %380 = vmatpush2.msra.mxu0 %v379
    %381 = vmatprep.subr.mxu0 0.0
    %v382 = vand.u32 %v52, 4294901760
    %383 = vmatpush2.msra.mxu0 %v382
    %384 = vmatprep.subr.mxu0 0.0
    %v385 = vand.u32 %v51, 4294901760
    %386 = vmatpush2.msra.mxu0 %v385
    %387 = vmatprep.subr.mxu0 0.0
    %v388 = vand.u32 %v50, 4294901760
    %389 = vmatpush2.msra.mxu0 %v388
    %v390 = vand.u32 %v285, 4294901760
    %v391 = vsub.f32 %v285, %v390
    %v392 = vand.u32 %v391, 4294901760
    %v393 = vsub.f32 %v391, %v392
    %v394 = vand.u32 %v393, 4294901760
    %395 = vmatprep.mubr.f32.mxu0 %v394
    %v396 = vand.u32 %v284, 4294901760
    %v397 = vsub.f32 %v284, %v396
    %v398 = vand.u32 %v397, 4294901760
    %v399 = vsub.f32 %v397, %v398
    %v400 = vand.u32 %v399, 4294901760
    %401 = vmatmul.mubr.f32.gmra.mxu0 %v400
    %v402 = vpop.f32.mrf.mxu0
    %v403 = vadd.f32 0.0, %v402
    %v404 = vpop.f32.mrf.mxu0
    %v405 = vand.u32 %v290, 4294901760
    %v406 = vsub.f32 %v290, %v405
    %v407 = vand.u32 %v406, 4294901760
    %v408 = vsub.f32 %v406, %v407
    %v409 = vand.u32 %v408, 4294901760
    %410 = vmatprep.mubr.f32.mxu0 %v409
    %v411 = vand.u32 %v289, 4294901760
    %v412 = vsub.f32 %v289, %v411
    %v413 = vand.u32 %v412, 4294901760
    %v414 = vsub.f32 %v412, %v413
    %v415 = vand.u32 %v414, 4294901760
    %416 = vmatmul.mubr.f32.gmra.mxu0 %v415
    %v417 = vpop.f32.mrf.mxu0
    %v418 = vadd.f32 0.0, %v417
    %v419 = vpop.f32.mrf.mxu0
    %420 = vdwg.mxu0
    %421 = vmatprep.subr.mxu0 0.0
    %v422 = vand.u32 %v49, 4294901760
    %v423 = vsub.f32 %v49, %v422
    %v424 = vand.u32 %v423, 4294901760
    %v425 = vsub.f32 %v423, %v424
    %v426 = vand.u32 %v425, 4294901760
    %427 = vmatpush1.msra.mxu0 %v426
    %428 = vmatprep.subr.mxu0 0.0
    %v429 = vand.u32 %v48, 4294901760
    %v430 = vsub.f32 %v48, %v429
    %v431 = vand.u32 %v430, 4294901760
    %v432 = vsub.f32 %v430, %v431
    %v433 = vand.u32 %v432, 4294901760
    %434 = vmatpush1.msra.mxu0 %v433
    %435 = vmatprep.subr.mxu0 0.0
    %v436 = vand.u32 %v47, 4294901760
    %v437 = vsub.f32 %v47, %v436
    %v438 = vand.u32 %v437, 4294901760
    %v439 = vsub.f32 %v437, %v438
    %v440 = vand.u32 %v439, 4294901760
    %441 = vmatpush1.msra.mxu0 %v440
    %442 = vmatprep.subr.mxu0 0.0
    %v443 = vand.u32 %v46, 4294901760
    %v444 = vsub.f32 %v46, %v443
    %v445 = vand.u32 %v444, 4294901760
    %v446 = vsub.f32 %v444, %v445
    %v447 = vand.u32 %v446, 4294901760
    %448 = vmatpush1.msra.mxu0 %v447
    %449 = vmatprep.subr.mxu0 0.0
    %v450 = vand.u32 %v45, 4294901760
    %v451 = vsub.f32 %v45, %v450
    %v452 = vand.u32 %v451, 4294901760
    %v453 = vsub.f32 %v451, %v452
    %v454 = vand.u32 %v453, 4294901760
    %455 = vmatpush1.msra.mxu0 %v454
    %456 = vmatprep.subr.mxu0 0.0
    %v457 = vand.u32 %v44, 4294901760
    %v458 = vsub.f32 %v44, %v457
    %v459 = vand.u32 %v458, 4294901760
    %v460 = vsub.f32 %v458, %v459
    %v461 = vand.u32 %v460, 4294901760
    %462 = vmatpush1.msra.mxu0 %v461
    %463 = vmatprep.subr.mxu0 0.0
    %v464 = vand.u32 %v43, 4294901760
    %v465 = vsub.f32 %v43, %v464
    %v466 = vand.u32 %v465, 4294901760
    %v467 = vsub.f32 %v465, %v466
    %v468 = vand.u32 %v467, 4294901760
    %469 = vmatpush1.msra.mxu0 %v468
    %470 = vmatprep.subr.mxu0 0.0
    %v471 = vand.u32 %v42, 4294901760
    %v472 = vsub.f32 %v42, %v471
    %v473 = vand.u32 %v472, 4294901760
    %v474 = vsub.f32 %v472, %v473
    %v475 = vand.u32 %v474, 4294901760
    %476 = vmatpush1.msra.mxu0 %v475
    %477 = vmatprep.subr.mxu0 0.0
    %v478 = vand.u32 %v41, 4294901760
    %v479 = vsub.f32 %v41, %v478
    %v480 = vand.u32 %v479, 4294901760
    %v481 = vsub.f32 %v479, %v480
    %v482 = vand.u32 %v481, 4294901760
    %483 = vmatpush1.msra.mxu0 %v482
    %484 = vmatprep.subr.mxu0 0.0
    %v485 = vand.u32 %v40, 4294901760
    %v486 = vsub.f32 %v40, %v485
    %v487 = vand.u32 %v486, 4294901760
    %v488 = vsub.f32 %v486, %v487
    %v489 = vand.u32 %v488, 4294901760
    %490 = vmatpush1.msra.mxu0 %v489
    %491 = vmatprep.subr.mxu0 0.0
    %v492 = vand.u32 %v39, 4294901760
    %v493 = vsub.f32 %v39, %v492
    %v494 = vand.u32 %v493, 4294901760
    %v495 = vsub.f32 %v493, %v494
    %v496 = vand.u32 %v495, 4294901760
    %497 = vmatpush1.msra.mxu0 %v496
    %498 = vmatprep.subr.mxu0 0.0
    %v499 = vand.u32 %v38, 4294901760
    %v500 = vsub.f32 %v38, %v499
    %v501 = vand.u32 %v500, 4294901760
    %v502 = vsub.f32 %v500, %v501
    %v503 = vand.u32 %v502, 4294901760
    %504 = vmatpush1.msra.mxu0 %v503
    %505 = vmatprep.subr.mxu0 0.0
    %v506 = vand.u32 %v37, 4294901760
    %v507 = vsub.f32 %v37, %v506
    %v508 = vand.u32 %v507, 4294901760
    %v509 = vsub.f32 %v507, %v508
    %v510 = vand.u32 %v509, 4294901760
    %511 = vmatpush1.msra.mxu0 %v510
    %512 = vmatprep.subr.mxu0 0.0
    %v513 = vand.u32 %v36, 4294901760
    %v514 = vsub.f32 %v36, %v513
    %v515 = vand.u32 %v514, 4294901760
    %v516 = vsub.f32 %v514, %v515
    %v517 = vand.u32 %v516, 4294901760
    %518 = vmatpush1.msra.mxu0 %v517
    %519 = vmatprep.subr.mxu0 0.0
    %v520 = vand.u32 %v35, 4294901760
    %v521 = vsub.f32 %v35, %v520
    %v522 = vand.u32 %v521, 4294901760
    %v523 = vsub.f32 %v521, %v522
    %v524 = vand.u32 %v523, 4294901760
    %525 = vmatpush1.msra.mxu0 %v524
    %526 = vmatprep.subr.mxu0 0.0
    %v527 = vand.u32 %v34, 4294901760
    %v528 = vsub.f32 %v34, %v527
    %v529 = vand.u32 %v528, 4294901760
    %v530 = vsub.f32 %v528, %v529
    %v531 = vand.u32 %v530, 4294901760
    %532 = vmatpush1.msra.mxu0 %v531
    %533 = vmatprep.subr.mxu0 0.0
    %v534 = vand.u32 %v65, 4294901760
    %v535 = vsub.f32 %v65, %v534
    %v536 = vand.u32 %v535, 4294901760
    %v537 = vsub.f32 %v535, %v536
    %v538 = vand.u32 %v537, 4294901760
    %539 = vmatpush2.msra.mxu0 %v538
    %540 = vmatprep.subr.mxu0 0.0
    %v541 = vand.u32 %v64, 4294901760
    %v542 = vsub.f32 %v64, %v541
    %v543 = vand.u32 %v542, 4294901760
    %v544 = vsub.f32 %v542, %v543
    %v545 = vand.u32 %v544, 4294901760
    %546 = vmatpush2.msra.mxu0 %v545
    %547 = vmatprep.subr.mxu0 0.0
    %v548 = vand.u32 %v63, 4294901760
    %v549 = vsub.f32 %v63, %v548
    %v550 = vand.u32 %v549, 4294901760
    %v551 = vsub.f32 %v549, %v550
    %v552 = vand.u32 %v551, 4294901760
    %553 = vmatpush2.msra.mxu0 %v552
    %554 = vmatprep.subr.mxu0 0.0
    %v555 = vand.u32 %v62, 4294901760
    %v556 = vsub.f32 %v62, %v555
    %v557 = vand.u32 %v556, 4294901760
    %v558 = vsub.f32 %v556, %v557
    %v559 = vand.u32 %v558, 4294901760
    %560 = vmatpush2.msra.mxu0 %v559
    %561 = vmatprep.subr.mxu0 0.0
    %v562 = vand.u32 %v61, 4294901760
    %v563 = vsub.f32 %v61, %v562
    %v564 = vand.u32 %v563, 4294901760
    %v565 = vsub.f32 %v563, %v564
    %v566 = vand.u32 %v565, 4294901760
    %567 = vmatpush2.msra.mxu0 %v566
    %568 = vmatprep.subr.mxu0 0.0
    %v569 = vand.u32 %v60, 4294901760
    %v570 = vsub.f32 %v60, %v569
    %v571 = vand.u32 %v570, 4294901760
    %v572 = vsub.f32 %v570, %v571
    %v573 = vand.u32 %v572, 4294901760
    %574 = vmatpush2.msra.mxu0 %v573
    %575 = vmatprep.subr.mxu0 0.0
    %v576 = vand.u32 %v59, 4294901760
    %v577 = vsub.f32 %v59, %v576
    %v578 = vand.u32 %v577, 4294901760
    %v579 = vsub.f32 %v577, %v578
    %v580 = vand.u32 %v579, 4294901760
    %581 = vmatpush2.msra.mxu0 %v580
    %582 = vmatprep.subr.mxu0 0.0
    %v583 = vand.u32 %v58, 4294901760
    %v584 = vsub.f32 %v58, %v583
    %v585 = vand.u32 %v584, 4294901760
    %v586 = vsub.f32 %v584, %v585
    %v587 = vand.u32 %v586, 4294901760
    %588 = vmatpush2.msra.mxu0 %v587
    %589 = vmatprep.subr.mxu0 0.0
    %v590 = vand.u32 %v57, 4294901760
    %v591 = vsub.f32 %v57, %v590
    %v592 = vand.u32 %v591, 4294901760
    %v593 = vsub.f32 %v591, %v592
    %v594 = vand.u32 %v593, 4294901760
    %595 = vmatpush2.msra.mxu0 %v594
    %596 = vmatprep.subr.mxu0 0.0
    %v597 = vand.u32 %v56, 4294901760
    %v598 = vsub.f32 %v56, %v597
    %v599 = vand.u32 %v598, 4294901760
    %v600 = vsub.f32 %v598, %v599
    %v601 = vand.u32 %v600, 4294901760
    %602 = vmatpush2.msra.mxu0 %v601
    %603 = vmatprep.subr.mxu0 0.0
    %v604 = vand.u32 %v55, 4294901760
    %v605 = vsub.f32 %v55, %v604
    %v606 = vand.u32 %v605, 4294901760
    %v607 = vsub.f32 %v605, %v606
    %v608 = vand.u32 %v607, 4294901760
    %609 = vmatpush2.msra.mxu0 %v608
    %610 = vmatprep.subr.mxu0 0.0
    %v611 = vand.u32 %v54, 4294901760
    %v612 = vsub.f32 %v54, %v611
    %v613 = vand.u32 %v612, 4294901760
    %v614 = vsub.f32 %v612, %v613
    %v615 = vand.u32 %v614, 4294901760
    %616 = vmatpush2.msra.mxu0 %v615
    %617 = vmatprep.subr.mxu0 0.0
    %v618 = vand.u32 %v53, 4294901760
    %v619 = vsub.f32 %v53, %v618
    %v620 = vand.u32 %v619, 4294901760
    %v621 = vsub.f32 %v619, %v620
    %v622 = vand.u32 %v621, 4294901760
    %623 = vmatpush2.msra.mxu0 %v622
    %624 = vmatprep.subr.mxu0 0.0
    %v625 = vand.u32 %v52, 4294901760
    %v626 = vsub.f32 %v52, %v625
    %v627 = vand.u32 %v626, 4294901760
    %v628 = vsub.f32 %v626, %v627
    %v629 = vand.u32 %v628, 4294901760
    %630 = vmatpush2.msra.mxu0 %v629
    %631 = vmatprep.subr.mxu0 0.0
    %v632 = vand.u32 %v51, 4294901760
    %v633 = vsub.f32 %v51, %v632
    %v634 = vand.u32 %v633, 4294901760
    %v635 = vsub.f32 %v633, %v634
    %v636 = vand.u32 %v635, 4294901760
    %637 = vmatpush2.msra.mxu0 %v636
    %638 = vmatprep.subr.mxu0 0.0
    %v639 = vand.u32 %v50, 4294901760
    %v640 = vsub.f32 %v50, %v639
    %v641 = vand.u32 %v640, 4294901760
    %v642 = vsub.f32 %v640, %v641
    %v643 = vand.u32 %v642, 4294901760
    %644 = vmatpush2.msra.mxu0 %v643
    %v645 = vand.u32 %v285, 4294901760
    %646 = vmatprep.mubr.f32.mxu0 %v645
    %v647 = vand.u32 %v284, 4294901760
    %648 = vmatmul.mubr.f32.gmra.mxu0 %v647
    %v649 = vpop.f32.mrf.mxu0
    %v650 = vadd.f32 %v403, %v649
    %v651 = vpop.f32.mrf.mxu0
    %v652 = vand.u32 %v290, 4294901760
    %653 = vmatprep.mubr.f32.mxu0 %v652
    %v654 = vand.u32 %v289, 4294901760
    %655 = vmatmul.mubr.f32.gmra.mxu0 %v654
    %v656 = vpop.f32.mrf.mxu0
    %v657 = vadd.f32 %v418, %v656
    %v658 = vpop.f32.mrf.mxu0
    %659 = vdwg.mxu0
    %660 = vmatprep.subr.mxu0 0.0
    %v661 = vand.u32 %v49, 4294901760
    %v662 = vsub.f32 %v49, %v661
    %663 = vmatpush1.msra.mxu0 %v662
    %664 = vmatprep.subr.mxu0 0.0
    %v665 = vand.u32 %v48, 4294901760
    %v666 = vsub.f32 %v48, %v665
    %667 = vmatpush1.msra.mxu0 %v666
    %668 = vmatprep.subr.mxu0 0.0
    %v669 = vand.u32 %v47, 4294901760
    %v670 = vsub.f32 %v47, %v669
    %671 = vmatpush1.msra.mxu0 %v670
    %672 = vmatprep.subr.mxu0 0.0
    %v673 = vand.u32 %v46, 4294901760
    %v674 = vsub.f32 %v46, %v673
    %675 = vmatpush1.msra.mxu0 %v674
    %676 = vmatprep.subr.mxu0 0.0
    %v677 = vand.u32 %v45, 4294901760
    %v678 = vsub.f32 %v45, %v677
    %679 = vmatpush1.msra.mxu0 %v678
    %680 = vmatprep.subr.mxu0 0.0
    %v681 = vand.u32 %v44, 4294901760
    %v682 = vsub.f32 %v44, %v681
    %683 = vmatpush1.msra.mxu0 %v682
    %684 = vmatprep.subr.mxu0 0.0
    %v685 = vand.u32 %v43, 4294901760
    %v686 = vsub.f32 %v43, %v685
    %687 = vmatpush1.msra.mxu0 %v686
    %688 = vmatprep.subr.mxu0 0.0
    %v689 = vand.u32 %v42, 4294901760
    %v690 = vsub.f32 %v42, %v689
    %691 = vmatpush1.msra.mxu0 %v690
    %692 = vmatprep.subr.mxu0 0.0
    %v693 = vand.u32 %v41, 4294901760
    %v694 = vsub.f32 %v41, %v693
    %695 = vmatpush1.msra.mxu0 %v694
    %696 = vmatprep.subr.mxu0 0.0
    %v697 = vand.u32 %v40, 4294901760
    %v698 = vsub.f32 %v40, %v697
    %699 = vmatpush1.msra.mxu0 %v698
    %700 = vmatprep.subr.mxu0 0.0
    %v701 = vand.u32 %v39, 4294901760
    %v702 = vsub.f32 %v39, %v701
    %703 = vmatpush1.msra.mxu0 %v702
    %704 = vmatprep.subr.mxu0 0.0
    %v705 = vand.u32 %v38, 4294901760
    %v706 = vsub.f32 %v38, %v705
    %707 = vmatpush1.msra.mxu0 %v706
    %708 = vmatprep.subr.mxu0 0.0
    %v709 = vand.u32 %v37, 4294901760
    %v710 = vsub.f32 %v37, %v709
    %711 = vmatpush1.msra.mxu0 %v710
    %712 = vmatprep.subr.mxu0 0.0
    %v713 = vand.u32 %v36, 4294901760
    %v714 = vsub.f32 %v36, %v713
    %715 = vmatpush1.msra.mxu0 %v714
    %716 = vmatprep.subr.mxu0 0.0
    %v717 = vand.u32 %v35, 4294901760
    %v718 = vsub.f32 %v35, %v717
    %719 = vmatpush1.msra.mxu0 %v718
    %720 = vmatprep.subr.mxu0 0.0
    %v721 = vand.u32 %v34, 4294901760
    %v722 = vsub.f32 %v34, %v721
    %723 = vmatpush1.msra.mxu0 %v722
    %724 = vmatprep.subr.mxu0 0.0
    %v725 = vand.u32 %v65, 4294901760
    %v726 = vsub.f32 %v65, %v725
    %727 = vmatpush2.msra.mxu0 %v726
    %728 = vmatprep.subr.mxu0 0.0
    %v729 = vand.u32 %v64, 4294901760
    %v730 = vsub.f32 %v64, %v729
    %731 = vmatpush2.msra.mxu0 %v730
    %732 = vmatprep.subr.mxu0 0.0
    %v733 = vand.u32 %v63, 4294901760
    %v734 = vsub.f32 %v63, %v733
    %735 = vmatpush2.msra.mxu0 %v734
    %736 = vmatprep.subr.mxu0 0.0
    %v737 = vand.u32 %v62, 4294901760
    %v738 = vsub.f32 %v62, %v737
    %739 = vmatpush2.msra.mxu0 %v738
    %740 = vmatprep.subr.mxu0 0.0
    %v741 = vand.u32 %v61, 4294901760
    %v742 = vsub.f32 %v61, %v741
    %743 = vmatpush2.msra.mxu0 %v742
    %744 = vmatprep.subr.mxu0 0.0
    %v745 = vand.u32 %v60, 4294901760
    %v746 = vsub.f32 %v60, %v745
    %747 = vmatpush2.msra.mxu0 %v746
    %748 = vmatprep.subr.mxu0 0.0
    %v749 = vand.u32 %v59, 4294901760
    %v750 = vsub.f32 %v59, %v749
    %751 = vmatpush2.msra.mxu0 %v750
    %752 = vmatprep.subr.mxu0 0.0
    %v753 = vand.u32 %v58, 4294901760
    %v754 = vsub.f32 %v58, %v753
    %755 = vmatpush2.msra.mxu0 %v754
    %756 = vmatprep.subr.mxu0 0.0
    %v757 = vand.u32 %v57, 4294901760
    %v758 = vsub.f32 %v57, %v757
    %759 = vmatpush2.msra.mxu0 %v758
    %760 = vmatprep.subr.mxu0 0.0
    %v761 = vand.u32 %v56, 4294901760
    %v762 = vsub.f32 %v56, %v761
    %763 = vmatpush2.msra.mxu0 %v762
    %764 = vmatprep.subr.mxu0 0.0
    %v765 = vand.u32 %v55, 4294901760
    %v766 = vsub.f32 %v55, %v765
    %767 = vmatpush2.msra.mxu0 %v766
    %768 = vmatprep.subr.mxu0 0.0
    %v769 = vand.u32 %v54, 4294901760
    %v770 = vsub.f32 %v54, %v769
    %771 = vmatpush2.msra.mxu0 %v770
    %772 = vmatprep.subr.mxu0 0.0
    %v773 = vand.u32 %v53, 4294901760
    %v774 = vsub.f32 %v53, %v773
    %775 = vmatpush2.msra.mxu0 %v774
    %776 = vmatprep.subr.mxu0 0.0
    %v777 = vand.u32 %v52, 4294901760
    %v778 = vsub.f32 %v52, %v777
    %779 = vmatpush2.msra.mxu0 %v778
    %780 = vmatprep.subr.mxu0 0.0
    %v781 = vand.u32 %v51, 4294901760
    %v782 = vsub.f32 %v51, %v781
    %783 = vmatpush2.msra.mxu0 %v782
    %784 = vmatprep.subr.mxu0 0.0
    %v785 = vand.u32 %v50, 4294901760
    %v786 = vsub.f32 %v50, %v785
    %787 = vmatpush2.msra.mxu0 %v786
    %v788 = vand.u32 %v285, 4294901760
    %v789 = vsub.f32 %v285, %v788
    %790 = vmatprep.mubr.f32.mxu0 %v789
    %v791 = vand.u32 %v284, 4294901760
    %v792 = vsub.f32 %v284, %v791
    %793 = vmatmul.mubr.f32.gmra.mxu0 %v792
    %v794 = vpop.f32.mrf.mxu0
    %v795 = vadd.f32 %v650, %v794
    %v796 = vpop.f32.mrf.mxu0
    %v797 = vand.u32 %v290, 4294901760
    %v798 = vsub.f32 %v290, %v797
    %799 = vmatprep.mubr.f32.mxu0 %v798
    %v800 = vand.u32 %v289, 4294901760
    %v801 = vsub.f32 %v289, %v800
    %802 = vmatmul.mubr.f32.gmra.mxu0 %v801
    %v803 = vpop.f32.mrf.mxu0
    %v804 = vadd.f32 %v657, %v803
    %v805 = vpop.f32.mrf.mxu0
    %806 = vdwg.mxu0
    %807 = vmatprep.subr.mxu0 0.0
    %v808 = vand.u32 %v49, 4294901760
    %809 = vmatpush1.msra.mxu0 %v808
    %810 = vmatprep.subr.mxu0 0.0
    %v811 = vand.u32 %v48, 4294901760
    %812 = vmatpush1.msra.mxu0 %v811
    %813 = vmatprep.subr.mxu0 0.0
    %v814 = vand.u32 %v47, 4294901760
    %815 = vmatpush1.msra.mxu0 %v814
    %816 = vmatprep.subr.mxu0 0.0
    %v817 = vand.u32 %v46, 4294901760
    %818 = vmatpush1.msra.mxu0 %v817
    %819 = vmatprep.subr.mxu0 0.0
    %v820 = vand.u32 %v45, 4294901760
    %821 = vmatpush1.msra.mxu0 %v820
    %822 = vmatprep.subr.mxu0 0.0
    %v823 = vand.u32 %v44, 4294901760
    %824 = vmatpush1.msra.mxu0 %v823
    %825 = vmatprep.subr.mxu0 0.0
    %v826 = vand.u32 %v43, 4294901760
    %827 = vmatpush1.msra.mxu0 %v826
    %828 = vmatprep.subr.mxu0 0.0
    %v829 = vand.u32 %v42, 4294901760
    %830 = vmatpush1.msra.mxu0 %v829
    %831 = vmatprep.subr.mxu0 0.0
    %v832 = vand.u32 %v41, 4294901760
    %833 = vmatpush1.msra.mxu0 %v832
    %834 = vmatprep.subr.mxu0 0.0
    %v835 = vand.u32 %v40, 4294901760
    %836 = vmatpush1.msra.mxu0 %v835
    %837 = vmatprep.subr.mxu0 0.0
    %v838 = vand.u32 %v39, 4294901760
    %839 = vmatpush1.msra.mxu0 %v838
    %840 = vmatprep.subr.mxu0 0.0
    %v841 = vand.u32 %v38, 4294901760
    %842 = vmatpush1.msra.mxu0 %v841
    %843 = vmatprep.subr.mxu0 0.0
    %v844 = vand.u32 %v37, 4294901760
    %845 = vmatpush1.msra.mxu0 %v844
    %846 = vmatprep.subr.mxu0 0.0
    %v847 = vand.u32 %v36, 4294901760
    %848 = vmatpush1.msra.mxu0 %v847
    %849 = vmatprep.subr.mxu0 0.0
    %v850 = vand.u32 %v35, 4294901760
    %851 = vmatpush1.msra.mxu0 %v850
    %852 = vmatprep.subr.mxu0 0.0
    %v853 = vand.u32 %v34, 4294901760
    %854 = vmatpush1.msra.mxu0 %v853
    %855 = vmatprep.subr.mxu0 0.0
    %v856 = vand.u32 %v65, 4294901760
    %857 = vmatpush2.msra.mxu0 %v856
    %858 = vmatprep.subr.mxu0 0.0
    %v859 = vand.u32 %v64, 4294901760
    %860 = vmatpush2.msra.mxu0 %v859
    %861 = vmatprep.subr.mxu0 0.0
    %v862 = vand.u32 %v63, 4294901760
    %863 = vmatpush2.msra.mxu0 %v862
    %864 = vmatprep.subr.mxu0 0.0
    %v865 = vand.u32 %v62, 4294901760
    %866 = vmatpush2.msra.mxu0 %v865
    %867 = vmatprep.subr.mxu0 0.0
    %v868 = vand.u32 %v61, 4294901760
    %869 = vmatpush2.msra.mxu0 %v868
    %870 = vmatprep.subr.mxu0 0.0
    %v871 = vand.u32 %v60, 4294901760
    %872 = vmatpush2.msra.mxu0 %v871
    %873 = vmatprep.subr.mxu0 0.0
    %v874 = vand.u32 %v59, 4294901760
    %875 = vmatpush2.msra.mxu0 %v874
    %876 = vmatprep.subr.mxu0 0.0
    %v877 = vand.u32 %v58, 4294901760
    %878 = vmatpush2.msra.mxu0 %v877
    %879 = vmatprep.subr.mxu0 0.0
    %v880 = vand.u32 %v57, 4294901760
    %881 = vmatpush2.msra.mxu0 %v880
    %882 = vmatprep.subr.mxu0 0.0
    %v883 = vand.u32 %v56, 4294901760
    %884 = vmatpush2.msra.mxu0 %v883
    %885 = vmatprep.subr.mxu0 0.0
    %v886 = vand.u32 %v55, 4294901760
    %887 = vmatpush2.msra.mxu0 %v886
    %888 = vmatprep.subr.mxu0 0.0
    %v889 = vand.u32 %v54, 4294901760
    %890 = vmatpush2.msra.mxu0 %v889
    %891 = vmatprep.subr.mxu0 0.0
    %v892 = vand.u32 %v53, 4294901760
    %893 = vmatpush2.msra.mxu0 %v892
    %894 = vmatprep.subr.mxu0 0.0
    %v895 = vand.u32 %v52, 4294901760
    %896 = vmatpush2.msra.mxu0 %v895
    %897 = vmatprep.subr.mxu0 0.0
    %v898 = vand.u32 %v51, 4294901760
    %899 = vmatpush2.msra.mxu0 %v898
    %900 = vmatprep.subr.mxu0 0.0
    %v901 = vand.u32 %v50, 4294901760
    %902 = vmatpush2.msra.mxu0 %v901
    %v903 = vand.u32 %v285, 4294901760
    %v904 = vsub.f32 %v285, %v903
    %v905 = vand.u32 %v904, 4294901760
    %906 = vmatprep.mubr.f32.mxu0 %v905
    %v907 = vand.u32 %v284, 4294901760
    %v908 = vsub.f32 %v284, %v907
    %v909 = vand.u32 %v908, 4294901760
    %910 = vmatmul.mubr.f32.gmra.mxu0 %v909
    %v911 = vpop.f32.mrf.mxu0
    %v912 = vadd.f32 %v795, %v911
    %v913 = vpop.f32.mrf.mxu0
    %v914 = vand.u32 %v290, 4294901760
    %v915 = vsub.f32 %v290, %v914
    %v916 = vand.u32 %v915, 4294901760
    %917 = vmatprep.mubr.f32.mxu0 %v916
    %v918 = vand.u32 %v289, 4294901760
    %v919 = vsub.f32 %v289, %v918
    %v920 = vand.u32 %v919, 4294901760
    %921 = vmatmul.mubr.f32.gmra.mxu0 %v920
    %v922 = vpop.f32.mrf.mxu0
    %v923 = vadd.f32 %v804, %v922
    %v924 = vpop.f32.mrf.mxu0
    %925 = vdwg.mxu0
    %926 = vmatprep.subr.mxu0 0.0
    %v927 = vand.u32 %v49, 4294901760
    %v928 = vsub.f32 %v49, %v927
    %v929 = vand.u32 %v928, 4294901760
    %930 = vmatpush1.msra.mxu0 %v929
    %931 = vmatprep.subr.mxu0 0.0
    %v932 = vand.u32 %v48, 4294901760
    %v933 = vsub.f32 %v48, %v932
    %v934 = vand.u32 %v933, 4294901760
    %935 = vmatpush1.msra.mxu0 %v934
    %936 = vmatprep.subr.mxu0 0.0
    %v937 = vand.u32 %v47, 4294901760
    %v938 = vsub.f32 %v47, %v937
    %v939 = vand.u32 %v938, 4294901760
    %940 = vmatpush1.msra.mxu0 %v939
    %941 = vmatprep.subr.mxu0 0.0
    %v942 = vand.u32 %v46, 4294901760
    %v943 = vsub.f32 %v46, %v942
    %v944 = vand.u32 %v943, 4294901760
    %945 = vmatpush1.msra.mxu0 %v944
    %946 = vmatprep.subr.mxu0 0.0
    %v947 = vand.u32 %v45, 4294901760
    %v948 = vsub.f32 %v45, %v947
    %v949 = vand.u32 %v948, 4294901760
    %950 = vmatpush1.msra.mxu0 %v949
    %951 = vmatprep.subr.mxu0 0.0
    %v952 = vand.u32 %v44, 4294901760
    %v953 = vsub.f32 %v44, %v952
    %v954 = vand.u32 %v953, 4294901760
    %955 = vmatpush1.msra.mxu0 %v954
    %956 = vmatprep.subr.mxu0 0.0
    %v957 = vand.u32 %v43, 4294901760
    %v958 = vsub.f32 %v43, %v957
    %v959 = vand.u32 %v958, 4294901760
    %960 = vmatpush1.msra.mxu0 %v959
    %961 = vmatprep.subr.mxu0 0.0
    %v962 = vand.u32 %v42, 4294901760
    %v963 = vsub.f32 %v42, %v962
    %v964 = vand.u32 %v963, 4294901760
    %965 = vmatpush1.msra.mxu0 %v964
    %966 = vmatprep.subr.mxu0 0.0
    %v967 = vand.u32 %v41, 4294901760
    %v968 = vsub.f32 %v41, %v967
    %v969 = vand.u32 %v968, 4294901760
    %970 = vmatpush1.msra.mxu0 %v969
    %971 = vmatprep.subr.mxu0 0.0
    %v972 = vand.u32 %v40, 4294901760
    %v973 = vsub.f32 %v40, %v972
    %v974 = vand.u32 %v973, 4294901760
    %975 = vmatpush1.msra.mxu0 %v974
    %976 = vmatprep.subr.mxu0 0.0
    %v977 = vand.u32 %v39, 4294901760
    %v978 = vsub.f32 %v39, %v977
    %v979 = vand.u32 %v978, 4294901760
    %980 = vmatpush1.msra.mxu0 %v979
    %981 = vmatprep.subr.mxu0 0.0
    %v982 = vand.u32 %v38, 4294901760
    %v983 = vsub.f32 %v38, %v982
    %v984 = vand.u32 %v983, 4294901760
    %985 = vmatpush1.msra.mxu0 %v984
    %986 = vmatprep.subr.mxu0 0.0
    %v987 = vand.u32 %v37, 4294901760
    %v988 = vsub.f32 %v37, %v987
    %v989 = vand.u32 %v988, 4294901760
    %990 = vmatpush1.msra.mxu0 %v989
    %991 = vmatprep.subr.mxu0 0.0
    %v992 = vand.u32 %v36, 4294901760
    %v993 = vsub.f32 %v36, %v992
    %v994 = vand.u32 %v993, 4294901760
    %995 = vmatpush1.msra.mxu0 %v994
    %996 = vmatprep.subr.mxu0 0.0
    %v997 = vand.u32 %v35, 4294901760
    %v998 = vsub.f32 %v35, %v997
    %v999 = vand.u32 %v998, 4294901760
    %1000 = vmatpush1.msra.mxu0 %v999
    %1001 = vmatprep.subr.mxu0 0.0
    %v1002 = vand.u32 %v34, 4294901760
    %v1003 = vsub.f32 %v34, %v1002
    %v1004 = vand.u32 %v1003, 4294901760
    %1005 = vmatpush1.msra.mxu0 %v1004
    %1006 = vmatprep.subr.mxu0 0.0
    %v1007 = vand.u32 %v65, 4294901760
    %v1008 = vsub.f32 %v65, %v1007
    %v1009 = vand.u32 %v1008, 4294901760
    %1010 = vmatpush2.msra.mxu0 %v1009
    %1011 = vmatprep.subr.mxu0 0.0
    %v1012 = vand.u32 %v64, 4294901760
    %v1013 = vsub.f32 %v64, %v1012
    %v1014 = vand.u32 %v1013, 4294901760
    %1015 = vmatpush2.msra.mxu0 %v1014
    %1016 = vmatprep.subr.mxu0 0.0
    %v1017 = vand.u32 %v63, 4294901760
    %v1018 = vsub.f32 %v63, %v1017
    %v1019 = vand.u32 %v1018, 4294901760
    %1020 = vmatpush2.msra.mxu0 %v1019
    %1021 = vmatprep.subr.mxu0 0.0
    %v1022 = vand.u32 %v62, 4294901760
    %v1023 = vsub.f32 %v62, %v1022
    %v1024 = vand.u32 %v1023, 4294901760
    %1025 = vmatpush2.msra.mxu0 %v1024
    %1026 = vmatprep.subr.mxu0 0.0
    %v1027 = vand.u32 %v61, 4294901760
    %v1028 = vsub.f32 %v61, %v1027
    %v1029 = vand.u32 %v1028, 4294901760
    %1030 = vmatpush2.msra.mxu0 %v1029
    %1031 = vmatprep.subr.mxu0 0.0
    %v1032 = vand.u32 %v60, 4294901760
    %v1033 = vsub.f32 %v60, %v1032
    %v1034 = vand.u32 %v1033, 4294901760
    %1035 = vmatpush2.msra.mxu0 %v1034
    %1036 = vmatprep.subr.mxu0 0.0
    %v1037 = vand.u32 %v59, 4294901760
    %v1038 = vsub.f32 %v59, %v1037
    %v1039 = vand.u32 %v1038, 4294901760
    %1040 = vmatpush2.msra.mxu0 %v1039
    %1041 = vmatprep.subr.mxu0 0.0
    %v1042 = vand.u32 %v58, 4294901760
    %v1043 = vsub.f32 %v58, %v1042
    %v1044 = vand.u32 %v1043, 4294901760
    %1045 = vmatpush2.msra.mxu0 %v1044
    %1046 = vmatprep.subr.mxu0 0.0
    %v1047 = vand.u32 %v57, 4294901760
    %v1048 = vsub.f32 %v57, %v1047
    %v1049 = vand.u32 %v1048, 4294901760
    %1050 = vmatpush2.msra.mxu0 %v1049
    %1051 = vmatprep.subr.mxu0 0.0
    %v1052 = vand.u32 %v56, 4294901760
    %v1053 = vsub.f32 %v56, %v1052
    %v1054 = vand.u32 %v1053, 4294901760
    %1055 = vmatpush2.msra.mxu0 %v1054
    %1056 = vmatprep.subr.mxu0 0.0
    %v1057 = vand.u32 %v55, 4294901760
    %v1058 = vsub.f32 %v55, %v1057
    %v1059 = vand.u32 %v1058, 4294901760
    %1060 = vmatpush2.msra.mxu0 %v1059
    %1061 = vmatprep.subr.mxu0 0.0
    %v1062 = vand.u32 %v54, 4294901760
    %v1063 = vsub.f32 %v54, %v1062
    %v1064 = vand.u32 %v1063, 4294901760
    %1065 = vmatpush2.msra.mxu0 %v1064
    %1066 = vmatprep.subr.mxu0 0.0
    %v1067 = vand.u32 %v53, 4294901760
    %v1068 = vsub.f32 %v53, %v1067
    %v1069 = vand.u32 %v1068, 4294901760
    %1070 = vmatpush2.msra.mxu0 %v1069
    %1071 = vmatprep.subr.mxu0 0.0
    %v1072 = vand.u32 %v52, 4294901760
    %v1073 = vsub.f32 %v52, %v1072
    %v1074 = vand.u32 %v1073, 4294901760
    %1075 = vmatpush2.msra.mxu0 %v1074
    %1076 = vmatprep.subr.mxu0 0.0
    %v1077 = vand.u32 %v51, 4294901760
    %v1078 = vsub.f32 %v51, %v1077
    %v1079 = vand.u32 %v1078, 4294901760
    %1080 = vmatpush2.msra.mxu0 %v1079
    %1081 = vmatprep.subr.mxu0 0.0
    %v1082 = vand.u32 %v50, 4294901760
    %v1083 = vsub.f32 %v50, %v1082
    %v1084 = vand.u32 %v1083, 4294901760
    %1085 = vmatpush2.msra.mxu0 %v1084
    %v1086 = vand.u32 %v285, 4294901760
    %1087 = vmatprep.mubr.f32.mxu0 %v1086
    %v1088 = vand.u32 %v284, 4294901760
    %1089 = vmatmul.mubr.f32.gmra.mxu0 %v1088
    %v1090 = vpop.f32.mrf.mxu0
    %v1091 = vadd.f32 %v912, %v1090
    %v1092 = vpop.f32.mrf.mxu0
    %v1093 = vand.u32 %v290, 4294901760
    %1094 = vmatprep.mubr.f32.mxu0 %v1093
    %v1095 = vand.u32 %v289, 4294901760
    %1096 = vmatmul.mubr.f32.gmra.mxu0 %v1095
    %v1097 = vpop.f32.mrf.mxu0
    %v1098 = vadd.f32 %v923, %v1097
    %v1099 = vpop.f32.mrf.mxu0
    %1100 = vdwg.mxu0
    %1101 = vmatprep.subr.mxu0 0.0
    %v1102 = vand.u32 %v49, 4294901760
    %1103 = vmatpush1.msra.mxu0 %v1102
    %1104 = vmatprep.subr.mxu0 0.0
    %v1105 = vand.u32 %v48, 4294901760
    %1106 = vmatpush1.msra.mxu0 %v1105
    %1107 = vmatprep.subr.mxu0 0.0
    %v1108 = vand.u32 %v47, 4294901760
    %1109 = vmatpush1.msra.mxu0 %v1108
    %1110 = vmatprep.subr.mxu0 0.0
    %v1111 = vand.u32 %v46, 4294901760
    %1112 = vmatpush1.msra.mxu0 %v1111
    %1113 = vmatprep.subr.mxu0 0.0
    %v1114 = vand.u32 %v45, 4294901760
    %1115 = vmatpush1.msra.mxu0 %v1114
    %1116 = vmatprep.subr.mxu0 0.0
    %v1117 = vand.u32 %v44, 4294901760
    %1118 = vmatpush1.msra.mxu0 %v1117
    %1119 = vmatprep.subr.mxu0 0.0
    %v1120 = vand.u32 %v43, 4294901760
    %1121 = vmatpush1.msra.mxu0 %v1120
    %1122 = vmatprep.subr.mxu0 0.0
    %v1123 = vand.u32 %v42, 4294901760
    %1124 = vmatpush1.msra.mxu0 %v1123
    %1125 = vmatprep.subr.mxu0 0.0
    %v1126 = vand.u32 %v41, 4294901760
    %1127 = vmatpush1.msra.mxu0 %v1126
    %1128 = vmatprep.subr.mxu0 0.0
    %v1129 = vand.u32 %v40, 4294901760
    %1130 = vmatpush1.msra.mxu0 %v1129
    %1131 = vmatprep.subr.mxu0 0.0
    %v1132 = vand.u32 %v39, 4294901760
    %1133 = vmatpush1.msra.mxu0 %v1132
    %1134 = vmatprep.subr.mxu0 0.0
    %v1135 = vand.u32 %v38, 4294901760
    %1136 = vmatpush1.msra.mxu0 %v1135
    %1137 = vmatprep.subr.mxu0 0.0
    %v1138 = vand.u32 %v37, 4294901760
    %1139 = vmatpush1.msra.mxu0 %v1138
    %1140 = vmatprep.subr.mxu0 0.0
    %v1141 = vand.u32 %v36, 4294901760
    %1142 = vmatpush1.msra.mxu0 %v1141
    %1143 = vmatprep.subr.mxu0 0.0
    %v1144 = vand.u32 %v35, 4294901760
    %1145 = vmatpush1.msra.mxu0 %v1144
    %1146 = vmatprep.subr.mxu0 0.0
    %v1147 = vand.u32 %v34, 4294901760
    %1148 = vmatpush1.msra.mxu0 %v1147
    %1149 = vmatprep.subr.mxu0 0.0
    %v1150 = vand.u32 %v65, 4294901760
    %1151 = vmatpush2.msra.mxu0 %v1150
    %1152 = vmatprep.subr.mxu0 0.0
    %v1153 = vand.u32 %v64, 4294901760
    %1154 = vmatpush2.msra.mxu0 %v1153
    %1155 = vmatprep.subr.mxu0 0.0
    %v1156 = vand.u32 %v63, 4294901760
    %1157 = vmatpush2.msra.mxu0 %v1156
    %1158 = vmatprep.subr.mxu0 0.0
    %v1159 = vand.u32 %v62, 4294901760
    %1160 = vmatpush2.msra.mxu0 %v1159
    %1161 = vmatprep.subr.mxu0 0.0
    %v1162 = vand.u32 %v61, 4294901760
    %1163 = vmatpush2.msra.mxu0 %v1162
    %1164 = vmatprep.subr.mxu0 0.0
    %v1165 = vand.u32 %v60, 4294901760
    %1166 = vmatpush2.msra.mxu0 %v1165
    %1167 = vmatprep.subr.mxu0 0.0
    %v1168 = vand.u32 %v59, 4294901760
    %1169 = vmatpush2.msra.mxu0 %v1168
    %1170 = vmatprep.subr.mxu0 0.0
    %v1171 = vand.u32 %v58, 4294901760
    %1172 = vmatpush2.msra.mxu0 %v1171
    %1173 = vmatprep.subr.mxu0 0.0
    %v1174 = vand.u32 %v57, 4294901760
    %1175 = vmatpush2.msra.mxu0 %v1174
    %1176 = vmatprep.subr.mxu0 0.0
    %v1177 = vand.u32 %v56, 4294901760
    %1178 = vmatpush2.msra.mxu0 %v1177
    %1179 = vmatprep.subr.mxu0 0.0
    %v1180 = vand.u32 %v55, 4294901760
    %1181 = vmatpush2.msra.mxu0 %v1180
    %1182 = vmatprep.subr.mxu0 0.0
    %v1183 = vand.u32 %v54, 4294901760
    %1184 = vmatpush2.msra.mxu0 %v1183
    %1185 = vmatprep.subr.mxu0 0.0
    %v1186 = vand.u32 %v53, 4294901760
    %1187 = vmatpush2.msra.mxu0 %v1186
    %1188 = vmatprep.subr.mxu0 0.0
    %v1189 = vand.u32 %v52, 4294901760
    %1190 = vmatpush2.msra.mxu0 %v1189
    %1191 = vmatprep.subr.mxu0 0.0
    %v1192 = vand.u32 %v51, 4294901760
    %1193 = vmatpush2.msra.mxu0 %v1192
    %1194 = vmatprep.subr.mxu0 0.0
    %v1195 = vand.u32 %v50, 4294901760
    %1196 = vmatpush2.msra.mxu0 %v1195
    %v1197 = vand.u32 %v285, 4294901760
    %1198 = vmatprep.mubr.f32.mxu0 %v1197
    %v1199 = vand.u32 %v284, 4294901760
    %1200 = vmatmul.mubr.f32.gmra.mxu0 %v1199
    %v1201 = vpop.f32.mrf.mxu0
    %v1202 = vadd.f32 %v1091, %v1201
    %v1203 = vpop.f32.mrf.mxu0
    %v1204 = vand.u32 %v290, 4294901760
    %1205 = vmatprep.mubr.f32.mxu0 %v1204
    %v1206 = vand.u32 %v289, 4294901760
    %1207 = vmatmul.mubr.f32.gmra.mxu0 %v1206
    %v1208 = vpop.f32.mrf.mxu0
    %v1209 = vadd.f32 %v1098, %v1208
    %v1210 = vpop.f32.mrf.mxu0
    %1211 = vdwg.mxu0
    %1212 = vmatprep.subr.mxu0 0.0
    %v1213 = vand.u32 %v81, 4294901760
    %1214 = vmatpush1.msra.mxu0 %v1213
    %1215 = vmatprep.subr.mxu0 0.0
    %v1216 = vand.u32 %v80, 4294901760
    %1217 = vmatpush1.msra.mxu0 %v1216
    %1218 = vmatprep.subr.mxu0 0.0
    %v1219 = vand.u32 %v79, 4294901760
    %1220 = vmatpush1.msra.mxu0 %v1219
    %1221 = vmatprep.subr.mxu0 0.0
    %v1222 = vand.u32 %v78, 4294901760
    %1223 = vmatpush1.msra.mxu0 %v1222
    %1224 = vmatprep.subr.mxu0 0.0
    %v1225 = vand.u32 %v77, 4294901760
    %1226 = vmatpush1.msra.mxu0 %v1225
    %1227 = vmatprep.subr.mxu0 0.0
    %v1228 = vand.u32 %v76, 4294901760
    %1229 = vmatpush1.msra.mxu0 %v1228
    %1230 = vmatprep.subr.mxu0 0.0
    %v1231 = vand.u32 %v75, 4294901760
    %1232 = vmatpush1.msra.mxu0 %v1231
    %1233 = vmatprep.subr.mxu0 0.0
    %v1234 = vand.u32 %v74, 4294901760
    %1235 = vmatpush1.msra.mxu0 %v1234
    %1236 = vmatprep.subr.mxu0 0.0
    %v1237 = vand.u32 %v73, 4294901760
    %1238 = vmatpush1.msra.mxu0 %v1237
    %1239 = vmatprep.subr.mxu0 0.0
    %v1240 = vand.u32 %v72, 4294901760
    %1241 = vmatpush1.msra.mxu0 %v1240
    %1242 = vmatprep.subr.mxu0 0.0
    %v1243 = vand.u32 %v71, 4294901760
    %1244 = vmatpush1.msra.mxu0 %v1243
    %1245 = vmatprep.subr.mxu0 0.0
    %v1246 = vand.u32 %v70, 4294901760
    %1247 = vmatpush1.msra.mxu0 %v1246
    %1248 = vmatprep.subr.mxu0 0.0
    %v1249 = vand.u32 %v69, 4294901760
    %1250 = vmatpush1.msra.mxu0 %v1249
    %1251 = vmatprep.subr.mxu0 0.0
    %v1252 = vand.u32 %v68, 4294901760
    %1253 = vmatpush1.msra.mxu0 %v1252
    %1254 = vmatprep.subr.mxu0 0.0
    %v1255 = vand.u32 %v67, 4294901760
    %1256 = vmatpush1.msra.mxu0 %v1255
    %1257 = vmatprep.subr.mxu0 0.0
    %v1258 = vand.u32 %v66, 4294901760
    %1259 = vmatpush1.msra.mxu0 %v1258
    %1260 = vmatprep.subr.mxu0 0.0
    %v1261 = vand.u32 %v97, 4294901760
    %1262 = vmatpush2.msra.mxu0 %v1261
    %1263 = vmatprep.subr.mxu0 0.0
    %v1264 = vand.u32 %v96, 4294901760
    %1265 = vmatpush2.msra.mxu0 %v1264
    %1266 = vmatprep.subr.mxu0 0.0
    %v1267 = vand.u32 %v95, 4294901760
    %1268 = vmatpush2.msra.mxu0 %v1267
    %1269 = vmatprep.subr.mxu0 0.0
    %v1270 = vand.u32 %v94, 4294901760
    %1271 = vmatpush2.msra.mxu0 %v1270
    %1272 = vmatprep.subr.mxu0 0.0
    %v1273 = vand.u32 %v93, 4294901760
    %1274 = vmatpush2.msra.mxu0 %v1273
    %1275 = vmatprep.subr.mxu0 0.0
    %v1276 = vand.u32 %v92, 4294901760
    %1277 = vmatpush2.msra.mxu0 %v1276
    %1278 = vmatprep.subr.mxu0 0.0
    %v1279 = vand.u32 %v91, 4294901760
    %1280 = vmatpush2.msra.mxu0 %v1279
    %1281 = vmatprep.subr.mxu0 0.0
    %v1282 = vand.u32 %v90, 4294901760
    %1283 = vmatpush2.msra.mxu0 %v1282
    %1284 = vmatprep.subr.mxu0 0.0
    %v1285 = vand.u32 %v89, 4294901760
    %1286 = vmatpush2.msra.mxu0 %v1285
    %1287 = vmatprep.subr.mxu0 0.0
    %v1288 = vand.u32 %v88, 4294901760
    %1289 = vmatpush2.msra.mxu0 %v1288
    %1290 = vmatprep.subr.mxu0 0.0
    %v1291 = vand.u32 %v87, 4294901760
    %1292 = vmatpush2.msra.mxu0 %v1291
    %1293 = vmatprep.subr.mxu0 0.0
    %v1294 = vand.u32 %v86, 4294901760
    %1295 = vmatpush2.msra.mxu0 %v1294
    %1296 = vmatprep.subr.mxu0 0.0
    %v1297 = vand.u32 %v85, 4294901760
    %1298 = vmatpush2.msra.mxu0 %v1297
    %1299 = vmatprep.subr.mxu0 0.0
    %v1300 = vand.u32 %v84, 4294901760
    %1301 = vmatpush2.msra.mxu0 %v1300
    %1302 = vmatprep.subr.mxu0 0.0
    %v1303 = vand.u32 %v83, 4294901760
    %1304 = vmatpush2.msra.mxu0 %v1303
    %1305 = vmatprep.subr.mxu0 0.0
    %v1306 = vand.u32 %v82, 4294901760
    %1307 = vmatpush2.msra.mxu0 %v1306
    %v1308 = vand.u32 %v287, 4294901760
    %v1309 = vsub.f32 %v287, %v1308
    %v1310 = vand.u32 %v1309, 4294901760
    %v1311 = vsub.f32 %v1309, %v1310
    %v1312 = vand.u32 %v1311, 4294901760
    %1313 = vmatprep.mubr.f32.mxu0 %v1312
    %v1314 = vand.u32 %v286, 4294901760
    %v1315 = vsub.f32 %v286, %v1314
    %v1316 = vand.u32 %v1315, 4294901760
    %v1317 = vsub.f32 %v1315, %v1316
    %v1318 = vand.u32 %v1317, 4294901760
    %1319 = vmatmul.mubr.f32.gmra.mxu0 %v1318
    %v1320 = vpop.f32.mrf.mxu0
    %v1321 = vadd.f32 %v1202, %v1320
    %v1322 = vpop.f32.mrf.mxu0
    %v1323 = vand.u32 %v292, 4294901760
    %v1324 = vsub.f32 %v292, %v1323
    %v1325 = vand.u32 %v1324, 4294901760
    %v1326 = vsub.f32 %v1324, %v1325
    %v1327 = vand.u32 %v1326, 4294901760
    %1328 = vmatprep.mubr.f32.mxu0 %v1327
    %v1329 = vand.u32 %v291, 4294901760
    %v1330 = vsub.f32 %v291, %v1329
    %v1331 = vand.u32 %v1330, 4294901760
    %v1332 = vsub.f32 %v1330, %v1331
    %v1333 = vand.u32 %v1332, 4294901760
    %1334 = vmatmul.mubr.f32.gmra.mxu0 %v1333
    %v1335 = vpop.f32.mrf.mxu0
    %v1336 = vadd.f32 %v1209, %v1335
    %v1337 = vpop.f32.mrf.mxu0
    %1338 = vdwg.mxu0
    %1339 = vmatprep.subr.mxu0 0.0
    %v1340 = vand.u32 %v81, 4294901760
    %v1341 = vsub.f32 %v81, %v1340
    %v1342 = vand.u32 %v1341, 4294901760
    %v1343 = vsub.f32 %v1341, %v1342
    %v1344 = vand.u32 %v1343, 4294901760
    %1345 = vmatpush1.msra.mxu0 %v1344
    %1346 = vmatprep.subr.mxu0 0.0
    %v1347 = vand.u32 %v80, 4294901760
    %v1348 = vsub.f32 %v80, %v1347
    %v1349 = vand.u32 %v1348, 4294901760
    %v1350 = vsub.f32 %v1348, %v1349
    %v1351 = vand.u32 %v1350, 4294901760
    %1352 = vmatpush1.msra.mxu0 %v1351
    %1353 = vmatprep.subr.mxu0 0.0
    %v1354 = vand.u32 %v79, 4294901760
    %v1355 = vsub.f32 %v79, %v1354
    %v1356 = vand.u32 %v1355, 4294901760
    %v1357 = vsub.f32 %v1355, %v1356
    %v1358 = vand.u32 %v1357, 4294901760
    %1359 = vmatpush1.msra.mxu0 %v1358
    %1360 = vmatprep.subr.mxu0 0.0
    %v1361 = vand.u32 %v78, 4294901760
    %v1362 = vsub.f32 %v78, %v1361
    %v1363 = vand.u32 %v1362, 4294901760
    %v1364 = vsub.f32 %v1362, %v1363
    %v1365 = vand.u32 %v1364, 4294901760
    %1366 = vmatpush1.msra.mxu0 %v1365
    %1367 = vmatprep.subr.mxu0 0.0
    %v1368 = vand.u32 %v77, 4294901760
    %v1369 = vsub.f32 %v77, %v1368
    %v1370 = vand.u32 %v1369, 4294901760
    %v1371 = vsub.f32 %v1369, %v1370
    %v1372 = vand.u32 %v1371, 4294901760
    %1373 = vmatpush1.msra.mxu0 %v1372
    %1374 = vmatprep.subr.mxu0 0.0
    %v1375 = vand.u32 %v76, 4294901760
    %v1376 = vsub.f32 %v76, %v1375
    %v1377 = vand.u32 %v1376, 4294901760
    %v1378 = vsub.f32 %v1376, %v1377
    %v1379 = vand.u32 %v1378, 4294901760
    %1380 = vmatpush1.msra.mxu0 %v1379
    %1381 = vmatprep.subr.mxu0 0.0
    %v1382 = vand.u32 %v75, 4294901760
    %v1383 = vsub.f32 %v75, %v1382
    %v1384 = vand.u32 %v1383, 4294901760
    %v1385 = vsub.f32 %v1383, %v1384
    %v1386 = vand.u32 %v1385, 4294901760
    %1387 = vmatpush1.msra.mxu0 %v1386
    %1388 = vmatprep.subr.mxu0 0.0
    %v1389 = vand.u32 %v74, 4294901760
    %v1390 = vsub.f32 %v74, %v1389
    %v1391 = vand.u32 %v1390, 4294901760
    %v1392 = vsub.f32 %v1390, %v1391
    %v1393 = vand.u32 %v1392, 4294901760
    %1394 = vmatpush1.msra.mxu0 %v1393
    %1395 = vmatprep.subr.mxu0 0.0
    %v1396 = vand.u32 %v73, 4294901760
    %v1397 = vsub.f32 %v73, %v1396
    %v1398 = vand.u32 %v1397, 4294901760
    %v1399 = vsub.f32 %v1397, %v1398
    %v1400 = vand.u32 %v1399, 4294901760
    %1401 = vmatpush1.msra.mxu0 %v1400
    %1402 = vmatprep.subr.mxu0 0.0
    %v1403 = vand.u32 %v72, 4294901760
    %v1404 = vsub.f32 %v72, %v1403
    %v1405 = vand.u32 %v1404, 4294901760
    %v1406 = vsub.f32 %v1404, %v1405
    %v1407 = vand.u32 %v1406, 4294901760
    %1408 = vmatpush1.msra.mxu0 %v1407
    %1409 = vmatprep.subr.mxu0 0.0
    %v1410 = vand.u32 %v71, 4294901760
    %v1411 = vsub.f32 %v71, %v1410
    %v1412 = vand.u32 %v1411, 4294901760
    %v1413 = vsub.f32 %v1411, %v1412
    %v1414 = vand.u32 %v1413, 4294901760
    %1415 = vmatpush1.msra.mxu0 %v1414
    %1416 = vmatprep.subr.mxu0 0.0
    %v1417 = vand.u32 %v70, 4294901760
    %v1418 = vsub.f32 %v70, %v1417
    %v1419 = vand.u32 %v1418, 4294901760
    %v1420 = vsub.f32 %v1418, %v1419
    %v1421 = vand.u32 %v1420, 4294901760
    %1422 = vmatpush1.msra.mxu0 %v1421
    %1423 = vmatprep.subr.mxu0 0.0
    %v1424 = vand.u32 %v69, 4294901760
    %v1425 = vsub.f32 %v69, %v1424
    %v1426 = vand.u32 %v1425, 4294901760
    %v1427 = vsub.f32 %v1425, %v1426
    %v1428 = vand.u32 %v1427, 4294901760
    %1429 = vmatpush1.msra.mxu0 %v1428
    %1430 = vmatprep.subr.mxu0 0.0
    %v1431 = vand.u32 %v68, 4294901760
    %v1432 = vsub.f32 %v68, %v1431
    %v1433 = vand.u32 %v1432, 4294901760
    %v1434 = vsub.f32 %v1432, %v1433
    %v1435 = vand.u32 %v1434, 4294901760
    %1436 = vmatpush1.msra.mxu0 %v1435
    %1437 = vmatprep.subr.mxu0 0.0
    %v1438 = vand.u32 %v67, 4294901760
    %v1439 = vsub.f32 %v67, %v1438
    %v1440 = vand.u32 %v1439, 4294901760
    %v1441 = vsub.f32 %v1439, %v1440
    %v1442 = vand.u32 %v1441, 4294901760
    %1443 = vmatpush1.msra.mxu0 %v1442
    %1444 = vmatprep.subr.mxu0 0.0
    %v1445 = vand.u32 %v66, 4294901760
    %v1446 = vsub.f32 %v66, %v1445
    %v1447 = vand.u32 %v1446, 4294901760
    %v1448 = vsub.f32 %v1446, %v1447
    %v1449 = vand.u32 %v1448, 4294901760
    %1450 = vmatpush1.msra.mxu0 %v1449
    %1451 = vmatprep.subr.mxu0 0.0
    %v1452 = vand.u32 %v97, 4294901760
    %v1453 = vsub.f32 %v97, %v1452
    %v1454 = vand.u32 %v1453, 4294901760
    %v1455 = vsub.f32 %v1453, %v1454
    %v1456 = vand.u32 %v1455, 4294901760
    %1457 = vmatpush2.msra.mxu0 %v1456
    %1458 = vmatprep.subr.mxu0 0.0
    %v1459 = vand.u32 %v96, 4294901760
    %v1460 = vsub.f32 %v96, %v1459
    %v1461 = vand.u32 %v1460, 4294901760
    %v1462 = vsub.f32 %v1460, %v1461
    %v1463 = vand.u32 %v1462, 4294901760
    %1464 = vmatpush2.msra.mxu0 %v1463
    %1465 = vmatprep.subr.mxu0 0.0
    %v1466 = vand.u32 %v95, 4294901760
    %v1467 = vsub.f32 %v95, %v1466
    %v1468 = vand.u32 %v1467, 4294901760
    %v1469 = vsub.f32 %v1467, %v1468
    %v1470 = vand.u32 %v1469, 4294901760
    %1471 = vmatpush2.msra.mxu0 %v1470
    %1472 = vmatprep.subr.mxu0 0.0
    %v1473 = vand.u32 %v94, 4294901760
    %v1474 = vsub.f32 %v94, %v1473
    %v1475 = vand.u32 %v1474, 4294901760
    %v1476 = vsub.f32 %v1474, %v1475
    %v1477 = vand.u32 %v1476, 4294901760
    %1478 = vmatpush2.msra.mxu0 %v1477
    %1479 = vmatprep.subr.mxu0 0.0
    %v1480 = vand.u32 %v93, 4294901760
    %v1481 = vsub.f32 %v93, %v1480
    %v1482 = vand.u32 %v1481, 4294901760
    %v1483 = vsub.f32 %v1481, %v1482
    %v1484 = vand.u32 %v1483, 4294901760
    %1485 = vmatpush2.msra.mxu0 %v1484
    %1486 = vmatprep.subr.mxu0 0.0
    %v1487 = vand.u32 %v92, 4294901760
    %v1488 = vsub.f32 %v92, %v1487
    %v1489 = vand.u32 %v1488, 4294901760
    %v1490 = vsub.f32 %v1488, %v1489
    %v1491 = vand.u32 %v1490, 4294901760
    %1492 = vmatpush2.msra.mxu0 %v1491
    %1493 = vmatprep.subr.mxu0 0.0
    %v1494 = vand.u32 %v91, 4294901760
    %v1495 = vsub.f32 %v91, %v1494
    %v1496 = vand.u32 %v1495, 4294901760
    %v1497 = vsub.f32 %v1495, %v1496
    %v1498 = vand.u32 %v1497, 4294901760
    %1499 = vmatpush2.msra.mxu0 %v1498
    %1500 = vmatprep.subr.mxu0 0.0
    %v1501 = vand.u32 %v90, 4294901760
    %v1502 = vsub.f32 %v90, %v1501
    %v1503 = vand.u32 %v1502, 4294901760
    %v1504 = vsub.f32 %v1502, %v1503
    %v1505 = vand.u32 %v1504, 4294901760
    %1506 = vmatpush2.msra.mxu0 %v1505
    %1507 = vmatprep.subr.mxu0 0.0
    %v1508 = vand.u32 %v89, 4294901760
    %v1509 = vsub.f32 %v89, %v1508
    %v1510 = vand.u32 %v1509, 4294901760
    %v1511 = vsub.f32 %v1509, %v1510
    %v1512 = vand.u32 %v1511, 4294901760
    %1513 = vmatpush2.msra.mxu0 %v1512
    %1514 = vmatprep.subr.mxu0 0.0
    %v1515 = vand.u32 %v88, 4294901760
    %v1516 = vsub.f32 %v88, %v1515
    %v1517 = vand.u32 %v1516, 4294901760
    %v1518 = vsub.f32 %v1516, %v1517
    %v1519 = vand.u32 %v1518, 4294901760
    %1520 = vmatpush2.msra.mxu0 %v1519
    %1521 = vmatprep.subr.mxu0 0.0
    %v1522 = vand.u32 %v87, 4294901760
    %v1523 = vsub.f32 %v87, %v1522
    %v1524 = vand.u32 %v1523, 4294901760
    %v1525 = vsub.f32 %v1523, %v1524
    %v1526 = vand.u32 %v1525, 4294901760
    %1527 = vmatpush2.msra.mxu0 %v1526
    %1528 = vmatprep.subr.mxu0 0.0
    %v1529 = vand.u32 %v86, 4294901760
    %v1530 = vsub.f32 %v86, %v1529
    %v1531 = vand.u32 %v1530, 4294901760
    %v1532 = vsub.f32 %v1530, %v1531
    %v1533 = vand.u32 %v1532, 4294901760
    %1534 = vmatpush2.msra.mxu0 %v1533
    %1535 = vmatprep.subr.mxu0 0.0
    %v1536 = vand.u32 %v85, 4294901760
    %v1537 = vsub.f32 %v85, %v1536
    %v1538 = vand.u32 %v1537, 4294901760
    %v1539 = vsub.f32 %v1537, %v1538
    %v1540 = vand.u32 %v1539, 4294901760
    %1541 = vmatpush2.msra.mxu0 %v1540
    %1542 = vmatprep.subr.mxu0 0.0
    %v1543 = vand.u32 %v84, 4294901760
    %v1544 = vsub.f32 %v84, %v1543
    %v1545 = vand.u32 %v1544, 4294901760
    %v1546 = vsub.f32 %v1544, %v1545
    %v1547 = vand.u32 %v1546, 4294901760
    %1548 = vmatpush2.msra.mxu0 %v1547
    %1549 = vmatprep.subr.mxu0 0.0
    %v1550 = vand.u32 %v83, 4294901760
    %v1551 = vsub.f32 %v83, %v1550
    %v1552 = vand.u32 %v1551, 4294901760
    %v1553 = vsub.f32 %v1551, %v1552
    %v1554 = vand.u32 %v1553, 4294901760
    %1555 = vmatpush2.msra.mxu0 %v1554
    %1556 = vmatprep.subr.mxu0 0.0
    %v1557 = vand.u32 %v82, 4294901760
    %v1558 = vsub.f32 %v82, %v1557
    %v1559 = vand.u32 %v1558, 4294901760
    %v1560 = vsub.f32 %v1558, %v1559
    %v1561 = vand.u32 %v1560, 4294901760
    %1562 = vmatpush2.msra.mxu0 %v1561
    %v1563 = vand.u32 %v287, 4294901760
    %1564 = vmatprep.mubr.f32.mxu0 %v1563
    %v1565 = vand.u32 %v286, 4294901760
    %1566 = vmatmul.mubr.f32.gmra.mxu0 %v1565
    %v1567 = vpop.f32.mrf.mxu0
    %v1568 = vadd.f32 %v1321, %v1567
    %v1569 = vpop.f32.mrf.mxu0
    %v1570 = vand.u32 %v292, 4294901760
    %1571 = vmatprep.mubr.f32.mxu0 %v1570
    %v1572 = vand.u32 %v291, 4294901760
    %1573 = vmatmul.mubr.f32.gmra.mxu0 %v1572
    %v1574 = vpop.f32.mrf.mxu0
    %v1575 = vadd.f32 %v1336, %v1574
    %v1576 = vpop.f32.mrf.mxu0
    %1577 = vdwg.mxu0
    %1578 = vmatprep.subr.mxu0 0.0
    %v1579 = vand.u32 %v81, 4294901760
    %v1580 = vsub.f32 %v81, %v1579
    %1581 = vmatpush1.msra.mxu0 %v1580
    %1582 = vmatprep.subr.mxu0 0.0
    %v1583 = vand.u32 %v80, 4294901760
    %v1584 = vsub.f32 %v80, %v1583
    %1585 = vmatpush1.msra.mxu0 %v1584
    %1586 = vmatprep.subr.mxu0 0.0
    %v1587 = vand.u32 %v79, 4294901760
    %v1588 = vsub.f32 %v79, %v1587
    %1589 = vmatpush1.msra.mxu0 %v1588
    %1590 = vmatprep.subr.mxu0 0.0
    %v1591 = vand.u32 %v78, 4294901760
    %v1592 = vsub.f32 %v78, %v1591
    %1593 = vmatpush1.msra.mxu0 %v1592
    %1594 = vmatprep.subr.mxu0 0.0
    %v1595 = vand.u32 %v77, 4294901760
    %v1596 = vsub.f32 %v77, %v1595
    %1597 = vmatpush1.msra.mxu0 %v1596
    %1598 = vmatprep.subr.mxu0 0.0
    %v1599 = vand.u32 %v76, 4294901760
    %v1600 = vsub.f32 %v76, %v1599
    %1601 = vmatpush1.msra.mxu0 %v1600
    %1602 = vmatprep.subr.mxu0 0.0
    %v1603 = vand.u32 %v75, 4294901760
    %v1604 = vsub.f32 %v75, %v1603
    %1605 = vmatpush1.msra.mxu0 %v1604
    %1606 = vmatprep.subr.mxu0 0.0
    %v1607 = vand.u32 %v74, 4294901760
    %v1608 = vsub.f32 %v74, %v1607
    %1609 = vmatpush1.msra.mxu0 %v1608
    %1610 = vmatprep.subr.mxu0 0.0
    %v1611 = vand.u32 %v73, 4294901760
    %v1612 = vsub.f32 %v73, %v1611
    %1613 = vmatpush1.msra.mxu0 %v1612
    %1614 = vmatprep.subr.mxu0 0.0
    %v1615 = vand.u32 %v72, 4294901760
    %v1616 = vsub.f32 %v72, %v1615
    %1617 = vmatpush1.msra.mxu0 %v1616
    %1618 = vmatprep.subr.mxu0 0.0
    %v1619 = vand.u32 %v71, 4294901760
    %v1620 = vsub.f32 %v71, %v1619
    %1621 = vmatpush1.msra.mxu0 %v1620
    %1622 = vmatprep.subr.mxu0 0.0
    %v1623 = vand.u32 %v70, 4294901760
    %v1624 = vsub.f32 %v70, %v1623
    %1625 = vmatpush1.msra.mxu0 %v1624
    %1626 = vmatprep.subr.mxu0 0.0
    %v1627 = vand.u32 %v69, 4294901760
    %v1628 = vsub.f32 %v69, %v1627
    %1629 = vmatpush1.msra.mxu0 %v1628
    %1630 = vmatprep.subr.mxu0 0.0
    %v1631 = vand.u32 %v68, 4294901760
    %v1632 = vsub.f32 %v68, %v1631
    %1633 = vmatpush1.msra.mxu0 %v1632
    %1634 = vmatprep.subr.mxu0 0.0
    %v1635 = vand.u32 %v67, 4294901760
    %v1636 = vsub.f32 %v67, %v1635
    %1637 = vmatpush1.msra.mxu0 %v1636
    %1638 = vmatprep.subr.mxu0 0.0
    %v1639 = vand.u32 %v66, 4294901760
    %v1640 = vsub.f32 %v66, %v1639
    %1641 = vmatpush1.msra.mxu0 %v1640
    %1642 = vmatprep.subr.mxu0 0.0
    %v1643 = vand.u32 %v97, 4294901760
    %v1644 = vsub.f32 %v97, %v1643
    %1645 = vmatpush2.msra.mxu0 %v1644
    %1646 = vmatprep.subr.mxu0 0.0
    %v1647 = vand.u32 %v96, 4294901760
    %v1648 = vsub.f32 %v96, %v1647
    %1649 = vmatpush2.msra.mxu0 %v1648
    %1650 = vmatprep.subr.mxu0 0.0
    %v1651 = vand.u32 %v95, 4294901760
    %v1652 = vsub.f32 %v95, %v1651
    %1653 = vmatpush2.msra.mxu0 %v1652
    %1654 = vmatprep.subr.mxu0 0.0
    %v1655 = vand.u32 %v94, 4294901760
    %v1656 = vsub.f32 %v94, %v1655
    %1657 = vmatpush2.msra.mxu0 %v1656
    %1658 = vmatprep.subr.mxu0 0.0
    %v1659 = vand.u32 %v93, 4294901760
    %v1660 = vsub.f32 %v93, %v1659
    %1661 = vmatpush2.msra.mxu0 %v1660
    %1662 = vmatprep.subr.mxu0 0.0
    %v1663 = vand.u32 %v92, 4294901760
    %v1664 = vsub.f32 %v92, %v1663
    %1665 = vmatpush2.msra.mxu0 %v1664
    %1666 = vmatprep.subr.mxu0 0.0
    %v1667 = vand.u32 %v91, 4294901760
    %v1668 = vsub.f32 %v91, %v1667
    %1669 = vmatpush2.msra.mxu0 %v1668
    %1670 = vmatprep.subr.mxu0 0.0
    %v1671 = vand.u32 %v90, 4294901760
    %v1672 = vsub.f32 %v90, %v1671
    %1673 = vmatpush2.msra.mxu0 %v1672
    %1674 = vmatprep.subr.mxu0 0.0
    %v1675 = vand.u32 %v89, 4294901760
    %v1676 = vsub.f32 %v89, %v1675
    %1677 = vmatpush2.msra.mxu0 %v1676
    %1678 = vmatprep.subr.mxu0 0.0
    %v1679 = vand.u32 %v88, 4294901760
    %v1680 = vsub.f32 %v88, %v1679
    %1681 = vmatpush2.msra.mxu0 %v1680
    %1682 = vmatprep.subr.mxu0 0.0
    %v1683 = vand.u32 %v87, 4294901760
    %v1684 = vsub.f32 %v87, %v1683
    %1685 = vmatpush2.msra.mxu0 %v1684
    %1686 = vmatprep.subr.mxu0 0.0
    %v1687 = vand.u32 %v86, 4294901760
    %v1688 = vsub.f32 %v86, %v1687
    %1689 = vmatpush2.msra.mxu0 %v1688
    %1690 = vmatprep.subr.mxu0 0.0
    %v1691 = vand.u32 %v85, 4294901760
    %v1692 = vsub.f32 %v85, %v1691
    %1693 = vmatpush2.msra.mxu0 %v1692
    %1694 = vmatprep.subr.mxu0 0.0
    %v1695 = vand.u32 %v84, 4294901760
    %v1696 = vsub.f32 %v84, %v1695
    %1697 = vmatpush2.msra.mxu0 %v1696
    %1698 = vmatprep.subr.mxu0 0.0
    %v1699 = vand.u32 %v83, 4294901760
    %v1700 = vsub.f32 %v83, %v1699
    %1701 = vmatpush2.msra.mxu0 %v1700
    %1702 = vmatprep.subr.mxu0 0.0
    %v1703 = vand.u32 %v82, 4294901760
    %v1704 = vsub.f32 %v82, %v1703
    %1705 = vmatpush2.msra.mxu0 %v1704
    %v1706 = vand.u32 %v287, 4294901760
    %v1707 = vsub.f32 %v287, %v1706
    %1708 = vmatprep.mubr.f32.mxu0 %v1707
    %v1709 = vand.u32 %v286, 4294901760
    %v1710 = vsub.f32 %v286, %v1709
    %1711 = vmatmul.mubr.f32.gmra.mxu0 %v1710
    %v1712 = vpop.f32.mrf.mxu0
    %v1713 = vadd.f32 %v1568, %v1712
    %v1714 = vpop.f32.mrf.mxu0
    %v1715 = vand.u32 %v292, 4294901760
    %v1716 = vsub.f32 %v292, %v1715
    %1717 = vmatprep.mubr.f32.mxu0 %v1716
    %v1718 = vand.u32 %v291, 4294901760
    %v1719 = vsub.f32 %v291, %v1718
    %1720 = vmatmul.mubr.f32.gmra.mxu0 %v1719
    %v1721 = vpop.f32.mrf.mxu0
    %v1722 = vadd.f32 %v1575, %v1721
    %v1723 = vpop.f32.mrf.mxu0
    %1724 = vdwg.mxu0
    %1725 = vmatprep.subr.mxu0 0.0
    %v1726 = vand.u32 %v81, 4294901760
    %1727 = vmatpush1.msra.mxu0 %v1726
    %1728 = vmatprep.subr.mxu0 0.0
    %v1729 = vand.u32 %v80, 4294901760
    %1730 = vmatpush1.msra.mxu0 %v1729
    %1731 = vmatprep.subr.mxu0 0.0
    %v1732 = vand.u32 %v79, 4294901760
    %1733 = vmatpush1.msra.mxu0 %v1732
    %1734 = vmatprep.subr.mxu0 0.0
    %v1735 = vand.u32 %v78, 4294901760
    %1736 = vmatpush1.msra.mxu0 %v1735
    %1737 = vmatprep.subr.mxu0 0.0
    %v1738 = vand.u32 %v77, 4294901760
    %1739 = vmatpush1.msra.mxu0 %v1738
    %1740 = vmatprep.subr.mxu0 0.0
    %v1741 = vand.u32 %v76, 4294901760
    %1742 = vmatpush1.msra.mxu0 %v1741
    %1743 = vmatprep.subr.mxu0 0.0
    %v1744 = vand.u32 %v75, 4294901760
    %1745 = vmatpush1.msra.mxu0 %v1744
    %1746 = vmatprep.subr.mxu0 0.0
    %v1747 = vand.u32 %v74, 4294901760
    %1748 = vmatpush1.msra.mxu0 %v1747
    %1749 = vmatprep.subr.mxu0 0.0
    %v1750 = vand.u32 %v73, 4294901760
    %1751 = vmatpush1.msra.mxu0 %v1750
    %1752 = vmatprep.subr.mxu0 0.0
    %v1753 = vand.u32 %v72, 4294901760
    %1754 = vmatpush1.msra.mxu0 %v1753
    %1755 = vmatprep.subr.mxu0 0.0
    %v1756 = vand.u32 %v71, 4294901760
    %1757 = vmatpush1.msra.mxu0 %v1756
    %1758 = vmatprep.subr.mxu0 0.0
    %v1759 = vand.u32 %v70, 4294901760
    %1760 = vmatpush1.msra.mxu0 %v1759
    %1761 = vmatprep.subr.mxu0 0.0
    %v1762 = vand.u32 %v69, 4294901760
    %1763 = vmatpush1.msra.mxu0 %v1762
    %1764 = vmatprep.subr.mxu0 0.0
    %v1765 = vand.u32 %v68, 4294901760
    %1766 = vmatpush1.msra.mxu0 %v1765
    %1767 = vmatprep.subr.mxu0 0.0
    %v1768 = vand.u32 %v67, 4294901760
    %1769 = vmatpush1.msra.mxu0 %v1768
    %1770 = vmatprep.subr.mxu0 0.0
    %v1771 = vand.u32 %v66, 4294901760
    %1772 = vmatpush1.msra.mxu0 %v1771
    %1773 = vmatprep.subr.mxu0 0.0
    %v1774 = vand.u32 %v97, 4294901760
    %1775 = vmatpush2.msra.mxu0 %v1774
    %1776 = vmatprep.subr.mxu0 0.0
    %v1777 = vand.u32 %v96, 4294901760
    %1778 = vmatpush2.msra.mxu0 %v1777
    %1779 = vmatprep.subr.mxu0 0.0
    %v1780 = vand.u32 %v95, 4294901760
    %1781 = vmatpush2.msra.mxu0 %v1780
    %1782 = vmatprep.subr.mxu0 0.0
    %v1783 = vand.u32 %v94, 4294901760
    %1784 = vmatpush2.msra.mxu0 %v1783
    %1785 = vmatprep.subr.mxu0 0.0
    %v1786 = vand.u32 %v93, 4294901760
    %1787 = vmatpush2.msra.mxu0 %v1786
    %1788 = vmatprep.subr.mxu0 0.0
    %v1789 = vand.u32 %v92, 4294901760
    %1790 = vmatpush2.msra.mxu0 %v1789
    %1791 = vmatprep.subr.mxu0 0.0
    %v1792 = vand.u32 %v91, 4294901760
    %1793 = vmatpush2.msra.mxu0 %v1792
    %1794 = vmatprep.subr.mxu0 0.0
    %v1795 = vand.u32 %v90, 4294901760
    %1796 = vmatpush2.msra.mxu0 %v1795
    %1797 = vmatprep.subr.mxu0 0.0
    %v1798 = vand.u32 %v89, 4294901760
    %1799 = vmatpush2.msra.mxu0 %v1798
    %1800 = vmatprep.subr.mxu0 0.0
    %v1801 = vand.u32 %v88, 4294901760
    %1802 = vmatpush2.msra.mxu0 %v1801
    %1803 = vmatprep.subr.mxu0 0.0
    %v1804 = vand.u32 %v87, 4294901760
    %1805 = vmatpush2.msra.mxu0 %v1804
    %1806 = vmatprep.subr.mxu0 0.0
    %v1807 = vand.u32 %v86, 4294901760
    %1808 = vmatpush2.msra.mxu0 %v1807
    %1809 = vmatprep.subr.mxu0 0.0
    %v1810 = vand.u32 %v85, 4294901760
    %1811 = vmatpush2.msra.mxu0 %v1810
    %1812 = vmatprep.subr.mxu0 0.0
    %v1813 = vand.u32 %v84, 4294901760
    %1814 = vmatpush2.msra.mxu0 %v1813
    %1815 = vmatprep.subr.mxu0 0.0
    %v1816 = vand.u32 %v83, 4294901760
    %1817 = vmatpush2.msra.mxu0 %v1816
    %1818 = vmatprep.subr.mxu0 0.0
    %v1819 = vand.u32 %v82, 4294901760
    %1820 = vmatpush2.msra.mxu0 %v1819
    %v1821 = vand.u32 %v287, 4294901760
    %v1822 = vsub.f32 %v287, %v1821
    %v1823 = vand.u32 %v1822, 4294901760
    %1824 = vmatprep.mubr.f32.mxu0 %v1823
    %v1825 = vand.u32 %v286, 4294901760
    %v1826 = vsub.f32 %v286, %v1825
    %v1827 = vand.u32 %v1826, 4294901760
    %1828 = vmatmul.mubr.f32.gmra.mxu0 %v1827
    %v1829 = vpop.f32.mrf.mxu0
    %v1830 = vadd.f32 %v1713, %v1829
    %v1831 = vpop.f32.mrf.mxu0
    %v1832 = vand.u32 %v292, 4294901760
    %v1833 = vsub.f32 %v292, %v1832
    %v1834 = vand.u32 %v1833, 4294901760
    %1835 = vmatprep.mubr.f32.mxu0 %v1834
    %v1836 = vand.u32 %v291, 4294901760
    %v1837 = vsub.f32 %v291, %v1836
    %v1838 = vand.u32 %v1837, 4294901760
    %1839 = vmatmul.mubr.f32.gmra.mxu0 %v1838
    %v1840 = vpop.f32.mrf.mxu0
    %v1841 = vadd.f32 %v1722, %v1840
    %v1842 = vpop.f32.mrf.mxu0
    %1843 = vdwg.mxu0
    %1844 = vmatprep.subr.mxu0 0.0
    %v1845 = vand.u32 %v81, 4294901760
    %v1846 = vsub.f32 %v81, %v1845
    %v1847 = vand.u32 %v1846, 4294901760
    %1848 = vmatpush1.msra.mxu0 %v1847
    %1849 = vmatprep.subr.mxu0 0.0
    %v1850 = vand.u32 %v80, 4294901760
    %v1851 = vsub.f32 %v80, %v1850
    %v1852 = vand.u32 %v1851, 4294901760
    %1853 = vmatpush1.msra.mxu0 %v1852
    %1854 = vmatprep.subr.mxu0 0.0
    %v1855 = vand.u32 %v79, 4294901760
    %v1856 = vsub.f32 %v79, %v1855
    %v1857 = vand.u32 %v1856, 4294901760
    %1858 = vmatpush1.msra.mxu0 %v1857
    %1859 = vmatprep.subr.mxu0 0.0
    %v1860 = vand.u32 %v78, 4294901760
    %v1861 = vsub.f32 %v78, %v1860
    %v1862 = vand.u32 %v1861, 4294901760
    %1863 = vmatpush1.msra.mxu0 %v1862
    %1864 = vmatprep.subr.mxu0 0.0
    %v1865 = vand.u32 %v77, 4294901760
    %v1866 = vsub.f32 %v77, %v1865
    %v1867 = vand.u32 %v1866, 4294901760
    %1868 = vmatpush1.msra.mxu0 %v1867
    %1869 = vmatprep.subr.mxu0 0.0
    %v1870 = vand.u32 %v76, 4294901760
    %v1871 = vsub.f32 %v76, %v1870
    %v1872 = vand.u32 %v1871, 4294901760
    %1873 = vmatpush1.msra.mxu0 %v1872
    %1874 = vmatprep.subr.mxu0 0.0
    %v1875 = vand.u32 %v75, 4294901760
    %v1876 = vsub.f32 %v75, %v1875
    %v1877 = vand.u32 %v1876, 4294901760
    %1878 = vmatpush1.msra.mxu0 %v1877
    %1879 = vmatprep.subr.mxu0 0.0
    %v1880 = vand.u32 %v74, 4294901760
    %v1881 = vsub.f32 %v74, %v1880
    %v1882 = vand.u32 %v1881, 4294901760
    %1883 = vmatpush1.msra.mxu0 %v1882
    %1884 = vmatprep.subr.mxu0 0.0
    %v1885 = vand.u32 %v73, 4294901760
    %v1886 = vsub.f32 %v73, %v1885
    %v1887 = vand.u32 %v1886, 4294901760
    %1888 = vmatpush1.msra.mxu0 %v1887
    %1889 = vmatprep.subr.mxu0 0.0
    %v1890 = vand.u32 %v72, 4294901760
    %v1891 = vsub.f32 %v72, %v1890
    %v1892 = vand.u32 %v1891, 4294901760
    %1893 = vmatpush1.msra.mxu0 %v1892
    %1894 = vmatprep.subr.mxu0 0.0
    %v1895 = vand.u32 %v71, 4294901760
    %v1896 = vsub.f32 %v71, %v1895
    %v1897 = vand.u32 %v1896, 4294901760
    %1898 = vmatpush1.msra.mxu0 %v1897
    %1899 = vmatprep.subr.mxu0 0.0
    %v1900 = vand.u32 %v70, 4294901760
    %v1901 = vsub.f32 %v70, %v1900
    %v1902 = vand.u32 %v1901, 4294901760
    %1903 = vmatpush1.msra.mxu0 %v1902
    %1904 = vmatprep.subr.mxu0 0.0
    %v1905 = vand.u32 %v69, 4294901760
    %v1906 = vsub.f32 %v69, %v1905
    %v1907 = vand.u32 %v1906, 4294901760
    %1908 = vmatpush1.msra.mxu0 %v1907
    %1909 = vmatprep.subr.mxu0 0.0
    %v1910 = vand.u32 %v68, 4294901760
    %v1911 = vsub.f32 %v68, %v1910
    %v1912 = vand.u32 %v1911, 4294901760
    %1913 = vmatpush1.msra.mxu0 %v1912
    %1914 = vmatprep.subr.mxu0 0.0
    %v1915 = vand.u32 %v67, 4294901760
    %v1916 = vsub.f32 %v67, %v1915
    %v1917 = vand.u32 %v1916, 4294901760
    %1918 = vmatpush1.msra.mxu0 %v1917
    %1919 = vmatprep.subr.mxu0 0.0
    %v1920 = vand.u32 %v66, 4294901760
    %v1921 = vsub.f32 %v66, %v1920
    %v1922 = vand.u32 %v1921, 4294901760
    %1923 = vmatpush1.msra.mxu0 %v1922
    %1924 = vmatprep.subr.mxu0 0.0
    %v1925 = vand.u32 %v97, 4294901760
    %v1926 = vsub.f32 %v97, %v1925
    %v1927 = vand.u32 %v1926, 4294901760
    %1928 = vmatpush2.msra.mxu0 %v1927
    %1929 = vmatprep.subr.mxu0 0.0
    %v1930 = vand.u32 %v96, 4294901760
    %v1931 = vsub.f32 %v96, %v1930
    %v1932 = vand.u32 %v1931, 4294901760
    %1933 = vmatpush2.msra.mxu0 %v1932
    %1934 = vmatprep.subr.mxu0 0.0
    %v1935 = vand.u32 %v95, 4294901760
    %v1936 = vsub.f32 %v95, %v1935
    %v1937 = vand.u32 %v1936, 4294901760
    %1938 = vmatpush2.msra.mxu0 %v1937
    %1939 = vmatprep.subr.mxu0 0.0
    %v1940 = vand.u32 %v94, 4294901760
    %v1941 = vsub.f32 %v94, %v1940
    %v1942 = vand.u32 %v1941, 4294901760
    %1943 = vmatpush2.msra.mxu0 %v1942
    %1944 = vmatprep.subr.mxu0 0.0
    %v1945 = vand.u32 %v93, 4294901760
    %v1946 = vsub.f32 %v93, %v1945
    %v1947 = vand.u32 %v1946, 4294901760
    %1948 = vmatpush2.msra.mxu0 %v1947
    %1949 = vmatprep.subr.mxu0 0.0
    %v1950 = vand.u32 %v92, 4294901760
    %v1951 = vsub.f32 %v92, %v1950
    %v1952 = vand.u32 %v1951, 4294901760
    %1953 = vmatpush2.msra.mxu0 %v1952
    %1954 = vmatprep.subr.mxu0 0.0
    %v1955 = vand.u32 %v91, 4294901760
    %v1956 = vsub.f32 %v91, %v1955
    %v1957 = vand.u32 %v1956, 4294901760
    %1958 = vmatpush2.msra.mxu0 %v1957
    %1959 = vmatprep.subr.mxu0 0.0
    %v1960 = vand.u32 %v90, 4294901760
    %v1961 = vsub.f32 %v90, %v1960
    %v1962 = vand.u32 %v1961, 4294901760
    %1963 = vmatpush2.msra.mxu0 %v1962
    %1964 = vmatprep.subr.mxu0 0.0
    %v1965 = vand.u32 %v89, 4294901760
    %v1966 = vsub.f32 %v89, %v1965
    %v1967 = vand.u32 %v1966, 4294901760
    %1968 = vmatpush2.msra.mxu0 %v1967
    %1969 = vmatprep.subr.mxu0 0.0
    %v1970 = vand.u32 %v88, 4294901760
    %v1971 = vsub.f32 %v88, %v1970
    %v1972 = vand.u32 %v1971, 4294901760
    %1973 = vmatpush2.msra.mxu0 %v1972
    %1974 = vmatprep.subr.mxu0 0.0
    %v1975 = vand.u32 %v87, 4294901760
    %v1976 = vsub.f32 %v87, %v1975
    %v1977 = vand.u32 %v1976, 4294901760
    %1978 = vmatpush2.msra.mxu0 %v1977
    %1979 = vmatprep.subr.mxu0 0.0
    %v1980 = vand.u32 %v86, 4294901760
    %v1981 = vsub.f32 %v86, %v1980
    %v1982 = vand.u32 %v1981, 4294901760
    %1983 = vmatpush2.msra.mxu0 %v1982
    %1984 = vmatprep.subr.mxu0 0.0
    %v1985 = vand.u32 %v85, 4294901760
    %v1986 = vsub.f32 %v85, %v1985
    %v1987 = vand.u32 %v1986, 4294901760
    %1988 = vmatpush2.msra.mxu0 %v1987
    %1989 = vmatprep.subr.mxu0 0.0
    %v1990 = vand.u32 %v84, 4294901760
    %v1991 = vsub.f32 %v84, %v1990
    %v1992 = vand.u32 %v1991, 4294901760
    %1993 = vmatpush2.msra.mxu0 %v1992
    %1994 = vmatprep.subr.mxu0 0.0
    %v1995 = vand.u32 %v83, 4294901760
    %v1996 = vsub.f32 %v83, %v1995
    %v1997 = vand.u32 %v1996, 4294901760
    %1998 = vmatpush2.msra.mxu0 %v1997
    %1999 = vmatprep.subr.mxu0 0.0
    %v2000 = vand.u32 %v82, 4294901760
    %v2001 = vsub.f32 %v82, %v2000
    %v2002 = vand.u32 %v2001, 4294901760
    %2003 = vmatpush2.msra.mxu0 %v2002
    %v2004 = vand.u32 %v287, 4294901760
    %2005 = vmatprep.mubr.f32.mxu0 %v2004
    %v2006 = vand.u32 %v286, 4294901760
    %2007 = vmatmul.mubr.f32.gmra.mxu0 %v2006
    %v2008 = vpop.f32.mrf.mxu0
    %v2009 = vadd.f32 %v1830, %v2008
    %v2010 = vpop.f32.mrf.mxu0
    %v2011 = vand.u32 %v292, 4294901760
    %2012 = vmatprep.mubr.f32.mxu0 %v2011
    %v2013 = vand.u32 %v291, 4294901760
    %2014 = vmatmul.mubr.f32.gmra.mxu0 %v2013
    %v2015 = vpop.f32.mrf.mxu0
    %v2016 = vadd.f32 %v1841, %v2015
    %v2017 = vpop.f32.mrf.mxu0
    %2018 = vdwg.mxu0
    %2019 = vmatprep.subr.mxu0 0.0
    %v2020 = vand.u32 %v81, 4294901760
    %2021 = vmatpush1.msra.mxu0 %v2020
    %2022 = vmatprep.subr.mxu0 0.0
    %v2023 = vand.u32 %v80, 4294901760
    %2024 = vmatpush1.msra.mxu0 %v2023
    %2025 = vmatprep.subr.mxu0 0.0
    %v2026 = vand.u32 %v79, 4294901760
    %2027 = vmatpush1.msra.mxu0 %v2026
    %2028 = vmatprep.subr.mxu0 0.0
    %v2029 = vand.u32 %v78, 4294901760
    %2030 = vmatpush1.msra.mxu0 %v2029
    %2031 = vmatprep.subr.mxu0 0.0
    %v2032 = vand.u32 %v77, 4294901760
    %2033 = vmatpush1.msra.mxu0 %v2032
    %2034 = vmatprep.subr.mxu0 0.0
    %v2035 = vand.u32 %v76, 4294901760
    %2036 = vmatpush1.msra.mxu0 %v2035
    %2037 = vmatprep.subr.mxu0 0.0
    %v2038 = vand.u32 %v75, 4294901760
    %2039 = vmatpush1.msra.mxu0 %v2038
    %2040 = vmatprep.subr.mxu0 0.0
    %v2041 = vand.u32 %v74, 4294901760
    %2042 = vmatpush1.msra.mxu0 %v2041
    %2043 = vmatprep.subr.mxu0 0.0
    %v2044 = vand.u32 %v73, 4294901760
    %2045 = vmatpush1.msra.mxu0 %v2044
    %2046 = vmatprep.subr.mxu0 0.0
    %v2047 = vand.u32 %v72, 4294901760
    %2048 = vmatpush1.msra.mxu0 %v2047
    %2049 = vmatprep.subr.mxu0 0.0
    %v2050 = vand.u32 %v71, 4294901760
    %2051 = vmatpush1.msra.mxu0 %v2050
    %2052 = vmatprep.subr.mxu0 0.0
    %v2053 = vand.u32 %v70, 4294901760
    %2054 = vmatpush1.msra.mxu0 %v2053
    %2055 = vmatprep.subr.mxu0 0.0
    %v2056 = vand.u32 %v69, 4294901760
    %2057 = vmatpush1.msra.mxu0 %v2056
    %2058 = vmatprep.subr.mxu0 0.0
    %v2059 = vand.u32 %v68, 4294901760
    %2060 = vmatpush1.msra.mxu0 %v2059
    %2061 = vmatprep.subr.mxu0 0.0
    %v2062 = vand.u32 %v67, 4294901760
    %2063 = vmatpush1.msra.mxu0 %v2062
    %2064 = vmatprep.subr.mxu0 0.0
    %v2065 = vand.u32 %v66, 4294901760
    %2066 = vmatpush1.msra.mxu0 %v2065
    %2067 = vmatprep.subr.mxu0 0.0
    %v2068 = vand.u32 %v97, 4294901760
    %2069 = vmatpush2.msra.mxu0 %v2068
    %2070 = vmatprep.subr.mxu0 0.0
    %v2071 = vand.u32 %v96, 4294901760
    %2072 = vmatpush2.msra.mxu0 %v2071
    %2073 = vmatprep.subr.mxu0 0.0
    %v2074 = vand.u32 %v95, 4294901760
    %2075 = vmatpush2.msra.mxu0 %v2074
    %2076 = vmatprep.subr.mxu0 0.0
    %v2077 = vand.u32 %v94, 4294901760
    %2078 = vmatpush2.msra.mxu0 %v2077
    %2079 = vmatprep.subr.mxu0 0.0
    %v2080 = vand.u32 %v93, 4294901760
    %2081 = vmatpush2.msra.mxu0 %v2080
    %2082 = vmatprep.subr.mxu0 0.0
    %v2083 = vand.u32 %v92, 4294901760
    %2084 = vmatpush2.msra.mxu0 %v2083
    %2085 = vmatprep.subr.mxu0 0.0
    %v2086 = vand.u32 %v91, 4294901760
    %2087 = vmatpush2.msra.mxu0 %v2086
    %2088 = vmatprep.subr.mxu0 0.0
    %v2089 = vand.u32 %v90, 4294901760
    %2090 = vmatpush2.msra.mxu0 %v2089
    %2091 = vmatprep.subr.mxu0 0.0
    %v2092 = vand.u32 %v89, 4294901760
    %2093 = vmatpush2.msra.mxu0 %v2092
    %2094 = vmatprep.subr.mxu0 0.0
    %v2095 = vand.u32 %v88, 4294901760
    %2096 = vmatpush2.msra.mxu0 %v2095
    %2097 = vmatprep.subr.mxu0 0.0
    %v2098 = vand.u32 %v87, 4294901760
    %2099 = vmatpush2.msra.mxu0 %v2098
    %2100 = vmatprep.subr.mxu0 0.0
    %v2101 = vand.u32 %v86, 4294901760
    %2102 = vmatpush2.msra.mxu0 %v2101
    %2103 = vmatprep.subr.mxu0 0.0
    %v2104 = vand.u32 %v85, 4294901760
    %2105 = vmatpush2.msra.mxu0 %v2104
    %2106 = vmatprep.subr.mxu0 0.0
    %v2107 = vand.u32 %v84, 4294901760
    %2108 = vmatpush2.msra.mxu0 %v2107
    %2109 = vmatprep.subr.mxu0 0.0
    %v2110 = vand.u32 %v83, 4294901760
    %2111 = vmatpush2.msra.mxu0 %v2110
    %2112 = vmatprep.subr.mxu0 0.0
    %v2113 = vand.u32 %v82, 4294901760
    %2114 = vmatpush2.msra.mxu0 %v2113
    %v2115 = vand.u32 %v287, 4294901760
    %2116 = vmatprep.mubr.f32.mxu0 %v2115
    %v2117 = vand.u32 %v286, 4294901760
    %2118 = vmatmul.mubr.f32.gmra.mxu0 %v2117
    %v2119 = vpop.f32.mrf.mxu0
    %v2120 = vadd.f32 %v2009, %v2119
    %v2121 = vpop.f32.mrf.mxu0
    %v2122 = vand.u32 %v292, 4294901760
    %2123 = vmatprep.mubr.f32.mxu0 %v2122
    %v2124 = vand.u32 %v291, 4294901760
    %2125 = vmatmul.mubr.f32.gmra.mxu0 %v2124
    %v2126 = vpop.f32.mrf.mxu0
    %v2127 = vadd.f32 %v2016, %v2126
    %v2128 = vpop.f32.mrf.mxu0
    %2129 = vdwg.mxu0
    %2130 = vmatprep.subr.mxu0 0.0
    %v2131 = vand.u32 %v113, 4294901760
    %2132 = vmatpush1.msra.mxu0 %v2131
    %2133 = vmatprep.subr.mxu0 0.0
    %v2134 = vand.u32 %v112, 4294901760
    %2135 = vmatpush1.msra.mxu0 %v2134
    %2136 = vmatprep.subr.mxu0 0.0
    %v2137 = vand.u32 %v111, 4294901760
    %2138 = vmatpush1.msra.mxu0 %v2137
    %2139 = vmatprep.subr.mxu0 0.0
    %v2140 = vand.u32 %v110, 4294901760
    %2141 = vmatpush1.msra.mxu0 %v2140
    %2142 = vmatprep.subr.mxu0 0.0
    %v2143 = vand.u32 %v109, 4294901760
    %2144 = vmatpush1.msra.mxu0 %v2143
    %2145 = vmatprep.subr.mxu0 0.0
    %v2146 = vand.u32 %v108, 4294901760
    %2147 = vmatpush1.msra.mxu0 %v2146
    %2148 = vmatprep.subr.mxu0 0.0
    %v2149 = vand.u32 %v107, 4294901760
    %2150 = vmatpush1.msra.mxu0 %v2149
    %2151 = vmatprep.subr.mxu0 0.0
    %v2152 = vand.u32 %v106, 4294901760
    %2153 = vmatpush1.msra.mxu0 %v2152
    %2154 = vmatprep.subr.mxu0 0.0
    %v2155 = vand.u32 %v105, 4294901760
    %2156 = vmatpush1.msra.mxu0 %v2155
    %2157 = vmatprep.subr.mxu0 0.0
    %v2158 = vand.u32 %v104, 4294901760
    %2159 = vmatpush1.msra.mxu0 %v2158
    %2160 = vmatprep.subr.mxu0 0.0
    %v2161 = vand.u32 %v103, 4294901760
    %2162 = vmatpush1.msra.mxu0 %v2161
    %2163 = vmatprep.subr.mxu0 0.0
    %v2164 = vand.u32 %v102, 4294901760
    %2165 = vmatpush1.msra.mxu0 %v2164
    %2166 = vmatprep.subr.mxu0 0.0
    %v2167 = vand.u32 %v101, 4294901760
    %2168 = vmatpush1.msra.mxu0 %v2167
    %2169 = vmatprep.subr.mxu0 0.0
    %v2170 = vand.u32 %v100, 4294901760
    %2171 = vmatpush1.msra.mxu0 %v2170
    %2172 = vmatprep.subr.mxu0 0.0
    %v2173 = vand.u32 %v99, 4294901760
    %2174 = vmatpush1.msra.mxu0 %v2173
    %2175 = vmatprep.subr.mxu0 0.0
    %v2176 = vand.u32 %v98, 4294901760
    %2177 = vmatpush1.msra.mxu0 %v2176
    %2178 = vmatprep.subr.mxu0 0.0
    %2179 = vmatpush2.msra.mxu0 0.0
    %2180 = vmatprep.subr.mxu0 0.0
    %2181 = vmatpush2.msra.mxu0 0.0
    %2182 = vmatprep.subr.mxu0 0.0
    %2183 = vmatpush2.msra.mxu0 0.0
    %2184 = vmatprep.subr.mxu0 0.0
    %2185 = vmatpush2.msra.mxu0 0.0
    %2186 = vmatprep.subr.mxu0 0.0
    %2187 = vmatpush2.msra.mxu0 0.0
    %2188 = vmatprep.subr.mxu0 0.0
    %2189 = vmatpush2.msra.mxu0 0.0
    %2190 = vmatprep.subr.mxu0 0.0
    %2191 = vmatpush2.msra.mxu0 0.0
    %2192 = vmatprep.subr.mxu0 0.0
    %2193 = vmatpush2.msra.mxu0 0.0
    %2194 = vmatprep.subr.mxu0 0.0
    %2195 = vmatpush2.msra.mxu0 0.0
    %2196 = vmatprep.subr.mxu0 0.0
    %2197 = vmatpush2.msra.mxu0 0.0
    %2198 = vmatprep.subr.mxu0 0.0
    %2199 = vmatpush2.msra.mxu0 0.0
    %2200 = vmatprep.subr.mxu0 0.0
    %2201 = vmatpush2.msra.mxu0 0.0
    %2202 = vmatprep.subr.mxu0 0.0
    %2203 = vmatpush2.msra.mxu0 0.0
    %2204 = vmatprep.subr.mxu0 0.0
    %2205 = vmatpush2.msra.mxu0 0.0
    %2206 = vmatprep.subr.mxu0 0.0
    %2207 = vmatpush2.msra.mxu0 0.0
    %2208 = vmatprep.subr.mxu0 0.0
    %2209 = vmatpush2.msra.mxu0 0.0
    %2210 = vmatprep.mubr.f32.mxu0 0.0
    %v2211 = vand.u32 %v288, 4294901760
    %v2212 = vsub.f32 %v288, %v2211
    %v2213 = vand.u32 %v2212, 4294901760
    %v2214 = vsub.f32 %v2212, %v2213
    %v2215 = vand.u32 %v2214, 4294901760
    %2216 = vmatmul.mubr.f32.gmra.mxu0 %v2215
    %v2217 = vpop.f32.mrf.mxu0
    %v2218 = vadd.f32 %v2120, %v2217
    %v2219 = vpop.f32.mrf.mxu0
    %2220 = vmatprep.mubr.f32.mxu0 0.0
    %v2221 = vand.u32 %v293, 4294901760
    %v2222 = vsub.f32 %v293, %v2221
    %v2223 = vand.u32 %v2222, 4294901760
    %v2224 = vsub.f32 %v2222, %v2223
    %v2225 = vand.u32 %v2224, 4294901760
    %2226 = vmatmul.mubr.f32.gmra.mxu0 %v2225
    %v2227 = vpop.f32.mrf.mxu0
    %v2228 = vadd.f32 %v2127, %v2227
    %v2229 = vpop.f32.mrf.mxu0
    %2230 = vdwg.mxu0
    %2231 = vmatprep.subr.mxu0 0.0
    %v2232 = vand.u32 %v113, 4294901760
    %v2233 = vsub.f32 %v113, %v2232
    %v2234 = vand.u32 %v2233, 4294901760
    %v2235 = vsub.f32 %v2233, %v2234
    %v2236 = vand.u32 %v2235, 4294901760
    %2237 = vmatpush1.msra.mxu0 %v2236
    %2238 = vmatprep.subr.mxu0 0.0
    %v2239 = vand.u32 %v112, 4294901760
    %v2240 = vsub.f32 %v112, %v2239
    %v2241 = vand.u32 %v2240, 4294901760
    %v2242 = vsub.f32 %v2240, %v2241
    %v2243 = vand.u32 %v2242, 4294901760
    %2244 = vmatpush1.msra.mxu0 %v2243
    %2245 = vmatprep.subr.mxu0 0.0
    %v2246 = vand.u32 %v111, 4294901760
    %v2247 = vsub.f32 %v111, %v2246
    %v2248 = vand.u32 %v2247, 4294901760
    %v2249 = vsub.f32 %v2247, %v2248
    %v2250 = vand.u32 %v2249, 4294901760
    %2251 = vmatpush1.msra.mxu0 %v2250
    %2252 = vmatprep.subr.mxu0 0.0
    %v2253 = vand.u32 %v110, 4294901760
    %v2254 = vsub.f32 %v110, %v2253
    %v2255 = vand.u32 %v2254, 4294901760
    %v2256 = vsub.f32 %v2254, %v2255
    %v2257 = vand.u32 %v2256, 4294901760
    %2258 = vmatpush1.msra.mxu0 %v2257
    %2259 = vmatprep.subr.mxu0 0.0
    %v2260 = vand.u32 %v109, 4294901760
    %v2261 = vsub.f32 %v109, %v2260
    %v2262 = vand.u32 %v2261, 4294901760
    %v2263 = vsub.f32 %v2261, %v2262
    %v2264 = vand.u32 %v2263, 4294901760
    %2265 = vmatpush1.msra.mxu0 %v2264
    %2266 = vmatprep.subr.mxu0 0.0
    %v2267 = vand.u32 %v108, 4294901760
    %v2268 = vsub.f32 %v108, %v2267
    %v2269 = vand.u32 %v2268, 4294901760
    %v2270 = vsub.f32 %v2268, %v2269
    %v2271 = vand.u32 %v2270, 4294901760
    %2272 = vmatpush1.msra.mxu0 %v2271
    %2273 = vmatprep.subr.mxu0 0.0
    %v2274 = vand.u32 %v107, 4294901760
    %v2275 = vsub.f32 %v107, %v2274
    %v2276 = vand.u32 %v2275, 4294901760
    %v2277 = vsub.f32 %v2275, %v2276
    %v2278 = vand.u32 %v2277, 4294901760
    %2279 = vmatpush1.msra.mxu0 %v2278
    %2280 = vmatprep.subr.mxu0 0.0
    %v2281 = vand.u32 %v106, 4294901760
    %v2282 = vsub.f32 %v106, %v2281
    %v2283 = vand.u32 %v2282, 4294901760
    %v2284 = vsub.f32 %v2282, %v2283
    %v2285 = vand.u32 %v2284, 4294901760
    %2286 = vmatpush1.msra.mxu0 %v2285
    %2287 = vmatprep.subr.mxu0 0.0
    %v2288 = vand.u32 %v105, 4294901760
    %v2289 = vsub.f32 %v105, %v2288
    %v2290 = vand.u32 %v2289, 4294901760
    %v2291 = vsub.f32 %v2289, %v2290
    %v2292 = vand.u32 %v2291, 4294901760
    %2293 = vmatpush1.msra.mxu0 %v2292
    %2294 = vmatprep.subr.mxu0 0.0
    %v2295 = vand.u32 %v104, 4294901760
    %v2296 = vsub.f32 %v104, %v2295
    %v2297 = vand.u32 %v2296, 4294901760
    %v2298 = vsub.f32 %v2296, %v2297
    %v2299 = vand.u32 %v2298, 4294901760
    %2300 = vmatpush1.msra.mxu0 %v2299
    %2301 = vmatprep.subr.mxu0 0.0
    %v2302 = vand.u32 %v103, 4294901760
    %v2303 = vsub.f32 %v103, %v2302
    %v2304 = vand.u32 %v2303, 4294901760
    %v2305 = vsub.f32 %v2303, %v2304
    %v2306 = vand.u32 %v2305, 4294901760
    %2307 = vmatpush1.msra.mxu0 %v2306
    %2308 = vmatprep.subr.mxu0 0.0
    %v2309 = vand.u32 %v102, 4294901760
    %v2310 = vsub.f32 %v102, %v2309
    %v2311 = vand.u32 %v2310, 4294901760
    %v2312 = vsub.f32 %v2310, %v2311
    %v2313 = vand.u32 %v2312, 4294901760
    %2314 = vmatpush1.msra.mxu0 %v2313
    %2315 = vmatprep.subr.mxu0 0.0
    %v2316 = vand.u32 %v101, 4294901760
    %v2317 = vsub.f32 %v101, %v2316
    %v2318 = vand.u32 %v2317, 4294901760
    %v2319 = vsub.f32 %v2317, %v2318
    %v2320 = vand.u32 %v2319, 4294901760
    %2321 = vmatpush1.msra.mxu0 %v2320
    %2322 = vmatprep.subr.mxu0 0.0
    %v2323 = vand.u32 %v100, 4294901760
    %v2324 = vsub.f32 %v100, %v2323
    %v2325 = vand.u32 %v2324, 4294901760
    %v2326 = vsub.f32 %v2324, %v2325
    %v2327 = vand.u32 %v2326, 4294901760
    %2328 = vmatpush1.msra.mxu0 %v2327
    %2329 = vmatprep.subr.mxu0 0.0
    %v2330 = vand.u32 %v99, 4294901760
    %v2331 = vsub.f32 %v99, %v2330
    %v2332 = vand.u32 %v2331, 4294901760
    %v2333 = vsub.f32 %v2331, %v2332
    %v2334 = vand.u32 %v2333, 4294901760
    %2335 = vmatpush1.msra.mxu0 %v2334
    %2336 = vmatprep.subr.mxu0 0.0
    %v2337 = vand.u32 %v98, 4294901760
    %v2338 = vsub.f32 %v98, %v2337
    %v2339 = vand.u32 %v2338, 4294901760
    %v2340 = vsub.f32 %v2338, %v2339
    %v2341 = vand.u32 %v2340, 4294901760
    %2342 = vmatpush1.msra.mxu0 %v2341
    %2343 = vmatprep.subr.mxu0 0.0
    %2344 = vmatpush2.msra.mxu0 0.0
    %2345 = vmatprep.subr.mxu0 0.0
    %2346 = vmatpush2.msra.mxu0 0.0
    %2347 = vmatprep.subr.mxu0 0.0
    %2348 = vmatpush2.msra.mxu0 0.0
    %2349 = vmatprep.subr.mxu0 0.0
    %2350 = vmatpush2.msra.mxu0 0.0
    %2351 = vmatprep.subr.mxu0 0.0
    %2352 = vmatpush2.msra.mxu0 0.0
    %2353 = vmatprep.subr.mxu0 0.0
    %2354 = vmatpush2.msra.mxu0 0.0
    %2355 = vmatprep.subr.mxu0 0.0
    %2356 = vmatpush2.msra.mxu0 0.0
    %2357 = vmatprep.subr.mxu0 0.0
    %2358 = vmatpush2.msra.mxu0 0.0
    %2359 = vmatprep.subr.mxu0 0.0
    %2360 = vmatpush2.msra.mxu0 0.0
    %2361 = vmatprep.subr.mxu0 0.0
    %2362 = vmatpush2.msra.mxu0 0.0
    %2363 = vmatprep.subr.mxu0 0.0
    %2364 = vmatpush2.msra.mxu0 0.0
    %2365 = vmatprep.subr.mxu0 0.0
    %2366 = vmatpush2.msra.mxu0 0.0
    %2367 = vmatprep.subr.mxu0 0.0
    %2368 = vmatpush2.msra.mxu0 0.0
    %2369 = vmatprep.subr.mxu0 0.0
    %2370 = vmatpush2.msra.mxu0 0.0
    %2371 = vmatprep.subr.mxu0 0.0
    %2372 = vmatpush2.msra.mxu0 0.0
    %2373 = vmatprep.subr.mxu0 0.0
    %2374 = vmatpush2.msra.mxu0 0.0
    %2375 = vmatprep.mubr.f32.mxu0 0.0
    %v2376 = vand.u32 %v288, 4294901760
    %2377 = vmatmul.mubr.f32.gmra.mxu0 %v2376
    %v2378 = vpop.f32.mrf.mxu0
    %v2379 = vadd.f32 %v2218, %v2378
    %v2380 = vpop.f32.mrf.mxu0
    %2381 = vmatprep.mubr.f32.mxu0 0.0
    %v2382 = vand.u32 %v293, 4294901760
    %2383 = vmatmul.mubr.f32.gmra.mxu0 %v2382
    %v2384 = vpop.f32.mrf.mxu0
    %v2385 = vadd.f32 %v2228, %v2384
    %v2386 = vpop.f32.mrf.mxu0
    %2387 = vdwg.mxu0
    %2388 = vmatprep.subr.mxu0 0.0
    %v2389 = vand.u32 %v113, 4294901760
    %v2390 = vsub.f32 %v113, %v2389
    %2391 = vmatpush1.msra.mxu0 %v2390
    %2392 = vmatprep.subr.mxu0 0.0
    %v2393 = vand.u32 %v112, 4294901760
    %v2394 = vsub.f32 %v112, %v2393
    %2395 = vmatpush1.msra.mxu0 %v2394
    %2396 = vmatprep.subr.mxu0 0.0
    %v2397 = vand.u32 %v111, 4294901760
    %v2398 = vsub.f32 %v111, %v2397
    %2399 = vmatpush1.msra.mxu0 %v2398
    %2400 = vmatprep.subr.mxu0 0.0
    %v2401 = vand.u32 %v110, 4294901760
    %v2402 = vsub.f32 %v110, %v2401
    %2403 = vmatpush1.msra.mxu0 %v2402
    %2404 = vmatprep.subr.mxu0 0.0
    %v2405 = vand.u32 %v109, 4294901760
    %v2406 = vsub.f32 %v109, %v2405
    %2407 = vmatpush1.msra.mxu0 %v2406
    %2408 = vmatprep.subr.mxu0 0.0
    %v2409 = vand.u32 %v108, 4294901760
    %v2410 = vsub.f32 %v108, %v2409
    %2411 = vmatpush1.msra.mxu0 %v2410
    %2412 = vmatprep.subr.mxu0 0.0
    %v2413 = vand.u32 %v107, 4294901760
    %v2414 = vsub.f32 %v107, %v2413
    %2415 = vmatpush1.msra.mxu0 %v2414
    %2416 = vmatprep.subr.mxu0 0.0
    %v2417 = vand.u32 %v106, 4294901760
    %v2418 = vsub.f32 %v106, %v2417
    %2419 = vmatpush1.msra.mxu0 %v2418
    %2420 = vmatprep.subr.mxu0 0.0
    %v2421 = vand.u32 %v105, 4294901760
    %v2422 = vsub.f32 %v105, %v2421
    %2423 = vmatpush1.msra.mxu0 %v2422
    %2424 = vmatprep.subr.mxu0 0.0
    %v2425 = vand.u32 %v104, 4294901760
    %v2426 = vsub.f32 %v104, %v2425
    %2427 = vmatpush1.msra.mxu0 %v2426
    %2428 = vmatprep.subr.mxu0 0.0
    %v2429 = vand.u32 %v103, 4294901760
    %v2430 = vsub.f32 %v103, %v2429
    %2431 = vmatpush1.msra.mxu0 %v2430
    %2432 = vmatprep.subr.mxu0 0.0
    %v2433 = vand.u32 %v102, 4294901760
    %v2434 = vsub.f32 %v102, %v2433
    %2435 = vmatpush1.msra.mxu0 %v2434
    %2436 = vmatprep.subr.mxu0 0.0
    %v2437 = vand.u32 %v101, 4294901760
    %v2438 = vsub.f32 %v101, %v2437
    %2439 = vmatpush1.msra.mxu0 %v2438
    %2440 = vmatprep.subr.mxu0 0.0
    %v2441 = vand.u32 %v100, 4294901760
    %v2442 = vsub.f32 %v100, %v2441
    %2443 = vmatpush1.msra.mxu0 %v2442
    %2444 = vmatprep.subr.mxu0 0.0
    %v2445 = vand.u32 %v99, 4294901760
    %v2446 = vsub.f32 %v99, %v2445
    %2447 = vmatpush1.msra.mxu0 %v2446
    %2448 = vmatprep.subr.mxu0 0.0
    %v2449 = vand.u32 %v98, 4294901760
    %v2450 = vsub.f32 %v98, %v2449
    %2451 = vmatpush1.msra.mxu0 %v2450
    %2452 = vmatprep.subr.mxu0 0.0
    %2453 = vmatpush2.msra.mxu0 0.0
    %2454 = vmatprep.subr.mxu0 0.0
    %2455 = vmatpush2.msra.mxu0 0.0
    %2456 = vmatprep.subr.mxu0 0.0
    %2457 = vmatpush2.msra.mxu0 0.0
    %2458 = vmatprep.subr.mxu0 0.0
    %2459 = vmatpush2.msra.mxu0 0.0
    %2460 = vmatprep.subr.mxu0 0.0
    %2461 = vmatpush2.msra.mxu0 0.0
    %2462 = vmatprep.subr.mxu0 0.0
    %2463 = vmatpush2.msra.mxu0 0.0
    %2464 = vmatprep.subr.mxu0 0.0
    %2465 = vmatpush2.msra.mxu0 0.0
    %2466 = vmatprep.subr.mxu0 0.0
    %2467 = vmatpush2.msra.mxu0 0.0
    %2468 = vmatprep.subr.mxu0 0.0
    %2469 = vmatpush2.msra.mxu0 0.0
    %2470 = vmatprep.subr.mxu0 0.0
    %2471 = vmatpush2.msra.mxu0 0.0
    %2472 = vmatprep.subr.mxu0 0.0
    %2473 = vmatpush2.msra.mxu0 0.0
    %2474 = vmatprep.subr.mxu0 0.0
    %2475 = vmatpush2.msra.mxu0 0.0
    %2476 = vmatprep.subr.mxu0 0.0
    %2477 = vmatpush2.msra.mxu0 0.0
    %2478 = vmatprep.subr.mxu0 0.0
    %2479 = vmatpush2.msra.mxu0 0.0
    %2480 = vmatprep.subr.mxu0 0.0
    %2481 = vmatpush2.msra.mxu0 0.0
    %2482 = vmatprep.subr.mxu0 0.0
    %2483 = vmatpush2.msra.mxu0 0.0
    %2484 = vmatprep.mubr.f32.mxu0 0.0
    %v2485 = vand.u32 %v288, 4294901760
    %v2486 = vsub.f32 %v288, %v2485
    %2487 = vmatmul.mubr.f32.gmra.mxu0 %v2486
    %v2488 = vpop.f32.mrf.mxu0
    %v2489 = vadd.f32 %v2379, %v2488
    %v2490 = vpop.f32.mrf.mxu0
    %2491 = vmatprep.mubr.f32.mxu0 0.0
    %v2492 = vand.u32 %v293, 4294901760
    %v2493 = vsub.f32 %v293, %v2492
    %2494 = vmatmul.mubr.f32.gmra.mxu0 %v2493
    %v2495 = vpop.f32.mrf.mxu0
    %v2496 = vadd.f32 %v2385, %v2495
    %v2497 = vpop.f32.mrf.mxu0
    %2498 = vdwg.mxu0
    %2499 = vmatprep.subr.mxu0 0.0
    %v2500 = vand.u32 %v113, 4294901760
    %2501 = vmatpush1.msra.mxu0 %v2500
    %2502 = vmatprep.subr.mxu0 0.0
    %v2503 = vand.u32 %v112, 4294901760
    %2504 = vmatpush1.msra.mxu0 %v2503
    %2505 = vmatprep.subr.mxu0 0.0
    %v2506 = vand.u32 %v111, 4294901760
    %2507 = vmatpush1.msra.mxu0 %v2506
    %2508 = vmatprep.subr.mxu0 0.0
    %v2509 = vand.u32 %v110, 4294901760
    %2510 = vmatpush1.msra.mxu0 %v2509
    %2511 = vmatprep.subr.mxu0 0.0
    %v2512 = vand.u32 %v109, 4294901760
    %2513 = vmatpush1.msra.mxu0 %v2512
    %2514 = vmatprep.subr.mxu0 0.0
    %v2515 = vand.u32 %v108, 4294901760
    %2516 = vmatpush1.msra.mxu0 %v2515
    %2517 = vmatprep.subr.mxu0 0.0
    %v2518 = vand.u32 %v107, 4294901760
    %2519 = vmatpush1.msra.mxu0 %v2518
    %2520 = vmatprep.subr.mxu0 0.0
    %v2521 = vand.u32 %v106, 4294901760
    %2522 = vmatpush1.msra.mxu0 %v2521
    %2523 = vmatprep.subr.mxu0 0.0
    %v2524 = vand.u32 %v105, 4294901760
    %2525 = vmatpush1.msra.mxu0 %v2524
    %2526 = vmatprep.subr.mxu0 0.0
    %v2527 = vand.u32 %v104, 4294901760
    %2528 = vmatpush1.msra.mxu0 %v2527
    %2529 = vmatprep.subr.mxu0 0.0
    %v2530 = vand.u32 %v103, 4294901760
    %2531 = vmatpush1.msra.mxu0 %v2530
    %2532 = vmatprep.subr.mxu0 0.0
    %v2533 = vand.u32 %v102, 4294901760
    %2534 = vmatpush1.msra.mxu0 %v2533
    %2535 = vmatprep.subr.mxu0 0.0
    %v2536 = vand.u32 %v101, 4294901760
    %2537 = vmatpush1.msra.mxu0 %v2536
    %2538 = vmatprep.subr.mxu0 0.0
    %v2539 = vand.u32 %v100, 4294901760
    %2540 = vmatpush1.msra.mxu0 %v2539
    %2541 = vmatprep.subr.mxu0 0.0
    %v2542 = vand.u32 %v99, 4294901760
    %2543 = vmatpush1.msra.mxu0 %v2542
    %2544 = vmatprep.subr.mxu0 0.0
    %v2545 = vand.u32 %v98, 4294901760
    %2546 = vmatpush1.msra.mxu0 %v2545
    %2547 = vmatprep.subr.mxu0 0.0
    %2548 = vmatpush2.msra.mxu0 0.0
    %2549 = vmatprep.subr.mxu0 0.0
    %2550 = vmatpush2.msra.mxu0 0.0
    %2551 = vmatprep.subr.mxu0 0.0
    %2552 = vmatpush2.msra.mxu0 0.0
    %2553 = vmatprep.subr.mxu0 0.0
    %2554 = vmatpush2.msra.mxu0 0.0
    %2555 = vmatprep.subr.mxu0 0.0
    %2556 = vmatpush2.msra.mxu0 0.0
    %2557 = vmatprep.subr.mxu0 0.0
    %2558 = vmatpush2.msra.mxu0 0.0
    %2559 = vmatprep.subr.mxu0 0.0
    %2560 = vmatpush2.msra.mxu0 0.0
    %2561 = vmatprep.subr.mxu0 0.0
    %2562 = vmatpush2.msra.mxu0 0.0
    %2563 = vmatprep.subr.mxu0 0.0
    %2564 = vmatpush2.msra.mxu0 0.0
    %2565 = vmatprep.subr.mxu0 0.0
    %2566 = vmatpush2.msra.mxu0 0.0
    %2567 = vmatprep.subr.mxu0 0.0
    %2568 = vmatpush2.msra.mxu0 0.0
    %2569 = vmatprep.subr.mxu0 0.0
    %2570 = vmatpush2.msra.mxu0 0.0
    %2571 = vmatprep.subr.mxu0 0.0
    %2572 = vmatpush2.msra.mxu0 0.0
    %2573 = vmatprep.subr.mxu0 0.0
    %2574 = vmatpush2.msra.mxu0 0.0
    %2575 = vmatprep.subr.mxu0 0.0
    %2576 = vmatpush2.msra.mxu0 0.0
    %2577 = vmatprep.subr.mxu0 0.0
    %2578 = vmatpush2.msra.mxu0 0.0
    %2579 = vmatprep.mubr.f32.mxu0 0.0
    %v2580 = vand.u32 %v288, 4294901760
    %v2581 = vsub.f32 %v288, %v2580
    %v2582 = vand.u32 %v2581, 4294901760
    %2583 = vmatmul.mubr.f32.gmra.mxu0 %v2582
    %v2584 = vpop.f32.mrf.mxu0
    %v2585 = vadd.f32 %v2489, %v2584
    %v2586 = vpop.f32.mrf.mxu0
    %2587 = vmatprep.mubr.f32.mxu0 0.0
    %v2588 = vand.u32 %v293, 4294901760
    %v2589 = vsub.f32 %v293, %v2588
    %v2590 = vand.u32 %v2589, 4294901760
    %2591 = vmatmul.mubr.f32.gmra.mxu0 %v2590
    %v2592 = vpop.f32.mrf.mxu0
    %v2593 = vadd.f32 %v2496, %v2592
    %v2594 = vpop.f32.mrf.mxu0
    %2595 = vdwg.mxu0
    %2596 = vmatprep.subr.mxu0 0.0
    %v2597 = vand.u32 %v113, 4294901760
    %v2598 = vsub.f32 %v113, %v2597
    %v2599 = vand.u32 %v2598, 4294901760
    %2600 = vmatpush1.msra.mxu0 %v2599
    %2601 = vmatprep.subr.mxu0 0.0
    %v2602 = vand.u32 %v112, 4294901760
    %v2603 = vsub.f32 %v112, %v2602
    %v2604 = vand.u32 %v2603, 4294901760
    %2605 = vmatpush1.msra.mxu0 %v2604
    %2606 = vmatprep.subr.mxu0 0.0
    %v2607 = vand.u32 %v111, 4294901760
    %v2608 = vsub.f32 %v111, %v2607
    %v2609 = vand.u32 %v2608, 4294901760
    %2610 = vmatpush1.msra.mxu0 %v2609
    %2611 = vmatprep.subr.mxu0 0.0
    %v2612 = vand.u32 %v110, 4294901760
    %v2613 = vsub.f32 %v110, %v2612
    %v2614 = vand.u32 %v2613, 4294901760
    %2615 = vmatpush1.msra.mxu0 %v2614
    %2616 = vmatprep.subr.mxu0 0.0
    %v2617 = vand.u32 %v109, 4294901760
    %v2618 = vsub.f32 %v109, %v2617
    %v2619 = vand.u32 %v2618, 4294901760
    %2620 = vmatpush1.msra.mxu0 %v2619
    %2621 = vmatprep.subr.mxu0 0.0
    %v2622 = vand.u32 %v108, 4294901760
    %v2623 = vsub.f32 %v108, %v2622
    %v2624 = vand.u32 %v2623, 4294901760
    %2625 = vmatpush1.msra.mxu0 %v2624
    %2626 = vmatprep.subr.mxu0 0.0
    %v2627 = vand.u32 %v107, 4294901760
    %v2628 = vsub.f32 %v107, %v2627
    %v2629 = vand.u32 %v2628, 4294901760
    %2630 = vmatpush1.msra.mxu0 %v2629
    %2631 = vmatprep.subr.mxu0 0.0
    %v2632 = vand.u32 %v106, 4294901760
    %v2633 = vsub.f32 %v106, %v2632
    %v2634 = vand.u32 %v2633, 4294901760
    %2635 = vmatpush1.msra.mxu0 %v2634
    %2636 = vmatprep.subr.mxu0 0.0
    %v2637 = vand.u32 %v105, 4294901760
    %v2638 = vsub.f32 %v105, %v2637
    %v2639 = vand.u32 %v2638, 4294901760
    %2640 = vmatpush1.msra.mxu0 %v2639
    %2641 = vmatprep.subr.mxu0 0.0
    %v2642 = vand.u32 %v104, 4294901760
    %v2643 = vsub.f32 %v104, %v2642
    %v2644 = vand.u32 %v2643, 4294901760
    %2645 = vmatpush1.msra.mxu0 %v2644
    %2646 = vmatprep.subr.mxu0 0.0
    %v2647 = vand.u32 %v103, 4294901760
    %v2648 = vsub.f32 %v103, %v2647
    %v2649 = vand.u32 %v2648, 4294901760
    %2650 = vmatpush1.msra.mxu0 %v2649
    %2651 = vmatprep.subr.mxu0 0.0
    %v2652 = vand.u32 %v102, 4294901760
    %v2653 = vsub.f32 %v102, %v2652
    %v2654 = vand.u32 %v2653, 4294901760
    %2655 = vmatpush1.msra.mxu0 %v2654
    %2656 = vmatprep.subr.mxu0 0.0
    %v2657 = vand.u32 %v101, 4294901760
    %v2658 = vsub.f32 %v101, %v2657
    %v2659 = vand.u32 %v2658, 4294901760
    %2660 = vmatpush1.msra.mxu0 %v2659
    %2661 = vmatprep.subr.mxu0 0.0
    %v2662 = vand.u32 %v100, 4294901760
    %v2663 = vsub.f32 %v100, %v2662
    %v2664 = vand.u32 %v2663, 4294901760
    %2665 = vmatpush1.msra.mxu0 %v2664
    %2666 = vmatprep.subr.mxu0 0.0
    %v2667 = vand.u32 %v99, 4294901760
    %v2668 = vsub.f32 %v99, %v2667
    %v2669 = vand.u32 %v2668, 4294901760
    %2670 = vmatpush1.msra.mxu0 %v2669
    %2671 = vmatprep.subr.mxu0 0.0
    %v2672 = vand.u32 %v98, 4294901760
    %v2673 = vsub.f32 %v98, %v2672
    %v2674 = vand.u32 %v2673, 4294901760
    %2675 = vmatpush1.msra.mxu0 %v2674
    %2676 = vmatprep.subr.mxu0 0.0
    %2677 = vmatpush2.msra.mxu0 0.0
    %2678 = vmatprep.subr.mxu0 0.0
    %2679 = vmatpush2.msra.mxu0 0.0
    %2680 = vmatprep.subr.mxu0 0.0
    %2681 = vmatpush2.msra.mxu0 0.0
    %2682 = vmatprep.subr.mxu0 0.0
    %2683 = vmatpush2.msra.mxu0 0.0
    %2684 = vmatprep.subr.mxu0 0.0
    %2685 = vmatpush2.msra.mxu0 0.0
    %2686 = vmatprep.subr.mxu0 0.0
    %2687 = vmatpush2.msra.mxu0 0.0
    %2688 = vmatprep.subr.mxu0 0.0
    %2689 = vmatpush2.msra.mxu0 0.0
    %2690 = vmatprep.subr.mxu0 0.0
    %2691 = vmatpush2.msra.mxu0 0.0
    %2692 = vmatprep.subr.mxu0 0.0
    %2693 = vmatpush2.msra.mxu0 0.0
    %2694 = vmatprep.subr.mxu0 0.0
    %2695 = vmatpush2.msra.mxu0 0.0
    %2696 = vmatprep.subr.mxu0 0.0
    %2697 = vmatpush2.msra.mxu0 0.0
    %2698 = vmatprep.subr.mxu0 0.0
    %2699 = vmatpush2.msra.mxu0 0.0
    %2700 = vmatprep.subr.mxu0 0.0
    %2701 = vmatpush2.msra.mxu0 0.0
    %2702 = vmatprep.subr.mxu0 0.0
    %2703 = vmatpush2.msra.mxu0 0.0
    %2704 = vmatprep.subr.mxu0 0.0
    %2705 = vmatpush2.msra.mxu0 0.0
    %2706 = vmatprep.subr.mxu0 0.0
    %2707 = vmatpush2.msra.mxu0 0.0
    %2708 = vmatprep.mubr.f32.mxu0 0.0
    %v2709 = vand.u32 %v288, 4294901760
    %2710 = vmatmul.mubr.f32.gmra.mxu0 %v2709
    %v2711 = vpop.f32.mrf.mxu0
    %v2712 = vadd.f32 %v2585, %v2711
    %v2713 = vpop.f32.mrf.mxu0
    %2714 = vmatprep.mubr.f32.mxu0 0.0
    %v2715 = vand.u32 %v293, 4294901760
    %2716 = vmatmul.mubr.f32.gmra.mxu0 %v2715
    %v2717 = vpop.f32.mrf.mxu0
    %v2718 = vadd.f32 %v2593, %v2717
    %v2719 = vpop.f32.mrf.mxu0
    %2720 = vdwg.mxu0
    %2721 = vmatprep.subr.mxu0 0.0
    %v2722 = vand.u32 %v113, 4294901760
    %2723 = vmatpush1.msra.mxu0 %v2722
    %2724 = vmatprep.subr.mxu0 0.0
    %v2725 = vand.u32 %v112, 4294901760
    %2726 = vmatpush1.msra.mxu0 %v2725
    %2727 = vmatprep.subr.mxu0 0.0
    %v2728 = vand.u32 %v111, 4294901760
    %2729 = vmatpush1.msra.mxu0 %v2728
    %2730 = vmatprep.subr.mxu0 0.0
    %v2731 = vand.u32 %v110, 4294901760
    %2732 = vmatpush1.msra.mxu0 %v2731
    %2733 = vmatprep.subr.mxu0 0.0
    %v2734 = vand.u32 %v109, 4294901760
    %2735 = vmatpush1.msra.mxu0 %v2734
    %2736 = vmatprep.subr.mxu0 0.0
    %v2737 = vand.u32 %v108, 4294901760
    %2738 = vmatpush1.msra.mxu0 %v2737
    %2739 = vmatprep.subr.mxu0 0.0
    %v2740 = vand.u32 %v107, 4294901760
    %2741 = vmatpush1.msra.mxu0 %v2740
    %2742 = vmatprep.subr.mxu0 0.0
    %v2743 = vand.u32 %v106, 4294901760
    %2744 = vmatpush1.msra.mxu0 %v2743
    %2745 = vmatprep.subr.mxu0 0.0
    %v2746 = vand.u32 %v105, 4294901760
    %2747 = vmatpush1.msra.mxu0 %v2746
    %2748 = vmatprep.subr.mxu0 0.0
    %v2749 = vand.u32 %v104, 4294901760
    %2750 = vmatpush1.msra.mxu0 %v2749
    %2751 = vmatprep.subr.mxu0 0.0
    %v2752 = vand.u32 %v103, 4294901760
    %2753 = vmatpush1.msra.mxu0 %v2752
    %2754 = vmatprep.subr.mxu0 0.0
    %v2755 = vand.u32 %v102, 4294901760
    %2756 = vmatpush1.msra.mxu0 %v2755
    %2757 = vmatprep.subr.mxu0 0.0
    %v2758 = vand.u32 %v101, 4294901760
    %2759 = vmatpush1.msra.mxu0 %v2758
    %2760 = vmatprep.subr.mxu0 0.0
    %v2761 = vand.u32 %v100, 4294901760
    %2762 = vmatpush1.msra.mxu0 %v2761
    %2763 = vmatprep.subr.mxu0 0.0
    %v2764 = vand.u32 %v99, 4294901760
    %2765 = vmatpush1.msra.mxu0 %v2764
    %2766 = vmatprep.subr.mxu0 0.0
    %v2767 = vand.u32 %v98, 4294901760
    %2768 = vmatpush1.msra.mxu0 %v2767
    %2769 = vmatprep.subr.mxu0 0.0
    %2770 = vmatpush2.msra.mxu0 0.0
    %2771 = vmatprep.subr.mxu0 0.0
    %2772 = vmatpush2.msra.mxu0 0.0
    %2773 = vmatprep.subr.mxu0 0.0
    %2774 = vmatpush2.msra.mxu0 0.0
    %2775 = vmatprep.subr.mxu0 0.0
    %2776 = vmatpush2.msra.mxu0 0.0
    %2777 = vmatprep.subr.mxu0 0.0
    %2778 = vmatpush2.msra.mxu0 0.0
    %2779 = vmatprep.subr.mxu0 0.0
    %2780 = vmatpush2.msra.mxu0 0.0
    %2781 = vmatprep.subr.mxu0 0.0
    %2782 = vmatpush2.msra.mxu0 0.0
    %2783 = vmatprep.subr.mxu0 0.0
    %2784 = vmatpush2.msra.mxu0 0.0
    %2785 = vmatprep.subr.mxu0 0.0
    %2786 = vmatpush2.msra.mxu0 0.0
    %2787 = vmatprep.subr.mxu0 0.0
    %2788 = vmatpush2.msra.mxu0 0.0
    %2789 = vmatprep.subr.mxu0 0.0
    %2790 = vmatpush2.msra.mxu0 0.0
    %2791 = vmatprep.subr.mxu0 0.0
    %2792 = vmatpush2.msra.mxu0 0.0
    %2793 = vmatprep.subr.mxu0 0.0
    %2794 = vmatpush2.msra.mxu0 0.0
    %2795 = vmatprep.subr.mxu0 0.0
    %2796 = vmatpush2.msra.mxu0 0.0
    %2797 = vmatprep.subr.mxu0 0.0
    %2798 = vmatpush2.msra.mxu0 0.0
    %2799 = vmatprep.subr.mxu0 0.0
    %2800 = vmatpush2.msra.mxu0 0.0
    %2801 = vmatprep.mubr.f32.mxu0 0.0
    %v2802 = vand.u32 %v288, 4294901760
    %2803 = vmatmul.mubr.f32.gmra.mxu0 %v2802
    %v2804 = vpop.f32.mrf.mxu0
    %v2805 = vadd.f32 %v2712, %v2804
    %v2806 = vpop.f32.mrf.mxu0
    %2807 = vmatprep.mubr.f32.mxu0 0.0
    %v2808 = vand.u32 %v293, 4294901760
    %2809 = vmatmul.mubr.f32.gmra.mxu0 %v2808
    %v2810 = vpop.f32.mrf.mxu0
    %v2811 = vadd.f32 %v2718, %v2810
    %v2812 = vpop.f32.mrf.mxu0
    %2813 = vdwg.mxu0
    %2814 = vadd.xlane.f32.xlu0 %v2805
    %v2815 = vpop.xlane.xlu0 %2814
    %2816 = vadd.xlane.f32.xlu0 %v2811
    %v2817 = vpop.xlane.xlu0 %2816
    %v2818 = vmul.f32 %v2805, %v2805
    %v2819 = vmul.f32 %v2811, %v2811
    %2820 = vadd.xlane.f32.xlu0 %v2818
    %v2821 = vpop.xlane.xlu0 %2820
    %2822 = vadd.xlane.f32.xlu0 %v2819
    %v2823 = vpop.xlane.xlu0 %2822
    %v2824 = vmul.f32 %v2815, 0.0078125
    %v2825 = vmul.f32 %v2817, 0.0078125
    %v2826 = vmul.f32 %v2821, 0.0078125
    %v2827 = vmul.f32 %v2823, 0.0078125
    %v2828 = vmul.f32 %v2824, %v2824
    %v2829 = vmul.f32 %v2825, %v2825
    %v2830 = vsub.f32 %v2826, %v2828
    %v2831 = vsub.f32 %v2827, %v2829
    %v2832 = vsub.f32 %v2805, %v2824
    %v2833 = vsub.f32 %v2811, %v2825
    %v2834 = vadd.f32 %v2830, 1e-12
    %v2835 = vadd.f32 %v2831, 1e-12
    %v2836 = vrsqrt.pop %v2834
    %v2837 = vrsqrt.pop %v2835
    %v2838 = vmul.f32 %v2832, %v2836
    %v2839 = vmul.f32 %v2833, %v2837
    %v2840 = vld [vmem:[%s2] sm:$0x1]
    %v2842 = vlaneseq
    %v2843 = vshrl.u32 %v2842, 7
    %v2844 = vsub.s32 0, %v2843
    %v2845 = vrot.slane %v2840, %v2844
    %v2847 = vmul.f32 %v2838, %v2845
    %v2848 = vmul.f32 %v2839, %v2845
    %v2849 = vld [vmem:[%s3] sm:$0x1]
    %v2851 = vlaneseq
    %v2852 = vshrl.u32 %v2851, 7
    %v2853 = vsub.s32 0, %v2852
    %v2854 = vrot.slane %v2849, %v2853
    %v2856 = vadd.f32 %v2847, %v2854
    %v2857 = vadd.f32 %v2848, %v2854
    %2858 = vst [vmem:[#allocation5] sm:$0xff] %v2856
    %2859 = vst [vmem:[#allocation5 + $0x8] sm:$0xff] %v2857
    // Predicated region
    $region22: #{tpu_custom_call.1} parent=1 // pred_check
      _
    $region23: #{tpu_custom_call.1} parent=1 // pred_check_branch
      %2861 = sbr.rel (0) target = $region25
    $region24: #{tpu_custom_call.1} parent=1 // pred_region
      %s2863 = ssub.s32 256, 256
      %2864 = vsyncadd [#allocation4], %s2863
      %s2865 = sshll.u32 [#allocation5], 4
      %s2866 = int_to_ptr.vmem [resolvable:$true] %s2865
      %2871 = dma.vmem_to_hbm [thread:$0]  %s2866, 256, %s4, [#allocation4], 128, 128, 8
    $region25: #{tpu_custom_call.1} parent=1 // pred_fallthru
      _
    // Predicated region
    $region26: #{tpu_custom_call.1} parent=1 // pred_check
      _
    $region27: #{tpu_custom_call.1} parent=1 // pred_check_branch
      %2873 = sbr.rel (0) target = $region29
    $region28: #{tpu_custom_call.1} parent=1 // pred_region
      %2874 = dma.done [#allocation4], 256
    $region29: #{tpu_custom_call.1} parent=1 // pred_fallthru
      _
    %2875 = vsyncpa [#allocation3], 1
    %2876 = vsyncpa [#allocation4], 1

</llo_original>
